<compile_context>
chip_gen: v6e
topology: v6e:2x2x1
jax: 0.10.0
libtpu: 0.0.40
codegen_flags: <defaults>
</compile_context>

<pallas_src>
import math

import jax
import jax.numpy as jnp
from jax import lax
from jax.experimental import pallas as pl
from jax.experimental.pallas import tpu as pltpu

_INV_SQRT2 = 1.0 / math.sqrt(2.0)
_MIB = 1024 * 1024


def _gelu_exact(x):
    # PyTorch nn.GELU default is the exact erf form (kept for semantic fidelity;
    # jax.nn.gelu(approximate=True) would offload to the EUP if tolerance allows).
    return 0.5 * x * (1.0 + lax.erf(x * _INV_SQRT2))


def _round_up(v, m):
    return (v + m - 1) // m * m


def _vmem_capacity_bytes():
    """Per-TensorCore VMEM capacity (v5e/v6e: 128 MiB, v7x: 64 MiB)."""
    try:
        info = pltpu.get_tpu_info()
        cap = getattr(info, "vmem_capacity_bytes", None)
        if cap:
            return int(cap)
    except Exception:
        pass
    return 64 * _MIB  # conservative fallback (v7x per-core figure)


def mlp_kernel(x_ref, w1_ref, b1_ref, w2_ref, b2_ref, o_ref, acc_ref):
    # x_ref  : (tm, Din_p)   token tile               (native/operand dtype)
    # w1_ref : (Din_p, tk)   fc1 weight, hidden chunk (native/operand dtype)
    # b1_ref : (1, tk)       fc1 bias,   hidden chunk
    # w2_ref : (tk, Dout_p)  fc2 weight, hidden chunk
    # b2_ref : (1, Dout_p)   fc2 bias
    # o_ref  : (tm, Dout_p)  output tile (resident across the hidden axis)
    # acc_ref: (tm, Dout_p)  f32 accumulator scratch
    j = pl.program_id(1)

    @pl.when(j == 0)
    def _init():
        # Seed the accumulator with the broadcast fc2 bias so no bias add is
        # needed at finalize time (and no separate zero store).
        acc_ref[...] = (jnp.zeros(acc_ref.shape, jnp.float32)
                        + b2_ref[...].astype(jnp.float32))

    # fc1 for this hidden chunk: native-dtype operands into the MXU, f32 accum.
    h = jnp.dot(x_ref[...], w1_ref[...], preferred_element_type=jnp.float32)
    h = h + b1_ref[...].astype(jnp.float32)
    h = _gelu_exact(h)
    # dropout(p=0.0) -> identity.

    # fc2 partial product for this hidden chunk, accumulated in f32.
    acc_ref[...] += jnp.dot(h.astype(w2_ref.dtype), w2_ref[...],
                            preferred_element_type=jnp.float32)

    @pl.when(j == pl.num_programs(1) - 1)
    def _finalize():
        o_ref[...] = acc_ref[...].astype(o_ref.dtype)
        # dropout(p=0.0) -> identity.


def mlp_forward(x, w1, b1, w2, b2, *, tm=None, tk_hid=512,
                operand_dtype=None, force_stream=False):
    """x: (..., Din). w1: (Din, Dhid), b1: (Dhid,), w2: (Dhid, Dout), b2: (Dout,).

    operand_dtype: optional MXU operand dtype (e.g. jnp.bfloat16); accumulation,
    biases and GELU stay f32 and the output keeps x's original dtype.
    force_stream: disable the weight-residency fast path (testing).
    """
    orig_shape = x.shape
    Din = orig_shape[-1]
    Dhid = w1.shape[1]
    Dout = w2.shape[1]
    T = int(math.prod(orig_shape[:-1])) if len(orig_shape) > 1 else 1
    out_dtype = x.dtype

    if operand_dtype is not None:
        x = x.astype(operand_dtype)
        w1 = w1.astype(operand_dtype)
        w2 = w2.astype(operand_dtype)

    op_sz = x.dtype.itemsize
    w_sz = w1.dtype.itemsize
    b_sz = b1.dtype.itemsize
    out_sz = jnp.dtype(out_dtype).itemsize

    # ---- lane-dense feature padding (multiples of 128) ----
    Din_p = _round_up(Din, 128)
    Dout_p = _round_up(Dout, 128)
    Dhid_p = _round_up(Dhid, 128)

    # ---- per-generation VMEM budget (per TensorCore) ----
    cap = _vmem_capacity_bytes()
    budget = max(cap - 16 * _MIB, 24 * _MIB)

    # ---- weight residency decision ----
    weight_bytes = (Din_p * Dhid_p + Dhid_p * Dout_p) * w_sz
    bias_bytes = 8 * (Dhid_p + Dout_p) * b_sz
    resident = (not force_stream) and (weight_bytes + bias_bytes <= budget // 3)

    if resident:
        tk = Dhid_p                       # hidden grid axis collapses to 1
    else:
        # Pick tk to divide Dhid_p with minimal padding (multiple of 128).
        tk_target = min(_round_up(tk_hid, 128), Dhid_p)
        n_chunks = -(-Dhid_p // tk_target)
        tk = _round_up(-(-Dhid_p // n_chunks), 128)
        Dhid_p = n_chunks * tk

    def vmem_estimate(tm_, tk_):
        return (2 * tm_ * Din_p * op_sz          # x tiles (double-buffered)
                + 2 * Din_p * tk_ * w_sz         # fc1 weight (worst case 2x)
                + 2 * tk_ * Dout_p * w_sz        # fc2 weight (worst case 2x)
                + 2 * 8 * (tk_ + Dout_p) * b_sz  # biases (sublane padded)
                + 2 * tm_ * Dout_p * out_sz      # output tiles
                + tm_ * Dout_p * 4               # f32 accumulator scratch
                + 2 * tm_ * tk_ * 4)             # f32 fc1 intermediate + temps

    # ---- token tile: large (default 512), shrunk only if VMEM doesn't fit ----
    tm_target = 512 if tm is None else tm
    tm = min(_round_up(tm_target, 16), _round_up(T, 16))
    while tm > 16 and vmem_estimate(tm, tk) > budget:
        tm = _round_up(max(tm // 2, 16), 16)
    T_p = _round_up(T, tm)

    # ---- pad operands (no-op for aligned shapes; zero pads contribute 0) ----
    # TODO(synk): handle the ragged last token tile / ragged Dout with masked
    # in-kernel stores instead of wrapper pad+slice to avoid the extra HBM pass.
    x2 = x.reshape(T, Din)
    if (T_p, Din_p) != (T, Din):
        x2 = jnp.pad(x2, ((0, T_p - T), (0, Din_p - Din)))
    w1p = jnp.pad(w1, ((0, Din_p - Din), (0, Dhid_p - Dhid)))
    b1p = jnp.pad(b1, (0, Dhid_p - Dhid)).reshape(1, Dhid_p)
    w2p = jnp.pad(w2, ((0, Dhid_p - Dhid), (0, Dout_p - Dout)))
    b2p = jnp.pad(b2, (0, Dout_p - Dout)).reshape(1, Dout_p)

    grid = (T_p // tm, Dhid_p // tk)
    vmem_limit = int(min(max(vmem_estimate(tm, tk) + 8 * _MIB, 32 * _MIB), cap))

    def build_in_specs(weight_pipeline_mode):
        wkw = ({} if weight_pipeline_mode is None
               else {"pipeline_mode": weight_pipeline_mode})
        return [
            pl.BlockSpec((tm, Din_p), lambda i, j: (i, 0)),           # x tile
            pl.BlockSpec((Din_p, tk), lambda i, j: (0, j), **wkw),    # fc1 W
            pl.BlockSpec((1, tk), lambda i, j: (0, j), **wkw),        # fc1 b
            pl.BlockSpec((tk, Dout_p), lambda i, j: (j, 0), **wkw),   # fc2 W
            pl.BlockSpec((1, Dout_p), lambda i, j: (0, 0), **wkw),    # fc2 b
        ]

    def run(in_specs):
        return pl.pallas_call(
            mlp_kernel,
            out_shape=jax.ShapeDtypeStruct((T_p, Dout_p), out_dtype),
            grid_spec=pltpu.PrefetchScalarGridSpec(
                num_scalar_prefetch=0,
                grid=grid,
                in_specs=in_specs,
                out_specs=pl.BlockSpec((tm, Dout_p), lambda i, j: (i, 0)),
                scratch_shapes=[pltpu.VMEM((tm, Dout_p), jnp.float32)],
            ),
            compiler_params=pltpu.CompilerParams(
                dimension_semantics=("parallel", "arbitrary"),
                vmem_limit_bytes=vmem_limit,
            ),
        )(x2, w1p, b1p, w2p, b2p)

    if resident:
        try:
            # Resident weights: constant block index over the whole grid
            # (DMA'd once); single-buffered so no useless second copy in VMEM.
            out_p = run(build_in_specs(pl.Buffered(1)))
        except Exception:
            out_p = run(build_in_specs(None))
    else:
        out_p = run(build_in_specs(None))

    if (T_p, Dout_p) != (T, Dout):
        out_p = out_p[:T, :Dout]
    return out_p.reshape(*orig_shape[:-1], Dout)


def reference_mlp(x, w1, b1, w2, b2):
    xf = x.astype(jnp.float32)
    h = xf @ w1.astype(jnp.float32) + b1.astype(jnp.float32)
    h = _gelu_exact(h)
    y = h @ w2.astype(jnp.float32) + b2.astype(jnp.float32)
    return y.astype(x.dtype)


if __name__ == "__main__":
    key = jax.random.PRNGKey(0)

    def make_params(k, din, dh, dout, dtype=jnp.float32):
        k1, kb1, k2, kb2 = jax.random.split(k, 4)
        w1 = (0.02 * jax.random.normal(k1, (din, dh))).astype(dtype)
        b1 = (0.02 * jax.random.normal(kb1, (dh,))).astype(dtype)
        w2 = (0.02 * jax.random.normal(k2, (dh, dout))).astype(dtype)
        b2 = (0.02 * jax.random.normal(kb2, (dout,))).astype(dtype)
        return w1, b1, w2, b2

    # Case 1: ragged dims; resident-weight fast path (single hidden chunk,
    # weights DMA'd once, accumulator seeded with b2).
    B, N, Din, Dh, Dout = 2, 100, 48, 200, 40
    kx, kp, key = jax.random.split(key, 3)
    x = jax.random.normal(kx, (B, N, Din), jnp.float32)
    w1, b1, w2, b2 = make_params(kp, Din, Dh, Dout)
    out = jax.block_until_ready(mlp_forward(x, w1, b1, w2, b2))
    ref = reference_mlp(x, w1, b1, w2, b2)
    assert out.shape == (B, N, Dout)
    assert jnp.allclose(out, ref, atol=1e-4, rtol=1e-3), "case 1 mismatch vs reference"

    # Case 2: aligned dims, forced hidden-axis streaming (exercises the
    # multi-chunk f32 accumulation path across the "arbitrary" grid axis).
    B, N, Din, Dh, Dout = 2, 128, 128, 512, 128
    kx, kp, key = jax.random.split(key, 3)
    x = jax.random.normal(kx, (B, N, Din), jnp.float32)
    w1, b1, w2, b2 = make_params(kp, Din, Dh, Dout)
    out = jax.block_until_ready(
        mlp_forward(x, w1, b1, w2, b2, tk_hid=128, force_stream=True))
    ref = reference_mlp(x, w1, b1, w2, b2)
    assert out.shape == (B, N, Dout)
    assert jnp.allclose(out, ref, atol=1e-4, rtol=1e-3), "case 2 mismatch vs reference"

    # Case 3: bf16 MXU operands (f32 accumulation/GELU/bias), resident weights.
    out = jax.block_until_ready(
        mlp_forward(x, w1, b1, w2, b2, operand_dtype=jnp.bfloat16))
    ref_bf16 = reference_mlp(
        x.astype(jnp.bfloat16).astype(jnp.float32),
        w1.astype(jnp.bfloat16).astype(jnp.float32), b1,
        w2.astype(jnp.bfloat16).astype(jnp.float32), b2)
    assert out.shape == (B, N, Dout)
    assert jnp.allclose(out, ref_bf16, atol=5e-3, rtol=5e-2), "case 3 mismatch vs reference"

    print("KERNEL_OK")
</pallas_src>

<mosaic_0001>
module attributes {stable_mosaic.version = 11 : i64} {
  func.func @mlp_kernel(%arg0: i32, %arg1: i32, %arg2: memref<208x128xf32, #tpu.memory_space<vmem>>, %arg3: memref<128x256xf32, #tpu.memory_space<vmem>>, %arg4: memref<1x256xf32, #tpu.memory_space<vmem>>, %arg5: memref<256x128xf32, #tpu.memory_space<vmem>>, %arg6: memref<1x128xf32, #tpu.memory_space<vmem>>, %arg7: memref<208x128xf32, #tpu.memory_space<vmem>>, %arg8: memref<208x128xf32, #tpu.memory_space<vmem>>) attributes {dimension_semantics = [#tpu.dimension_semantics<parallel>, #tpu.dimension_semantics<arbitrary>], iteration_bounds = array<i64: 1, 1>, scalar_prefetch = 0 : i64, scratch_operands = 1 : i64, tpu.core_type = #tpu.core_type<tc>, window_params = [{transform_indices = @transform_0, window_bounds = array<i64: 208, 128>}, {pipeline_mode = #tpu.pipeline_mode<synchronous>, transform_indices = @transform_1, window_bounds = array<i64: 128, 256>}, {pipeline_mode = #tpu.pipeline_mode<synchronous>, transform_indices = @transform_2, window_bounds = array<i64: 1, 256>}, {pipeline_mode = #tpu.pipeline_mode<synchronous>, transform_indices = @transform_3, window_bounds = array<i64: 256, 128>}, {pipeline_mode = #tpu.pipeline_mode<synchronous>, transform_indices = @transform_4, window_bounds = array<i64: 1, 128>}, {transform_indices = @transform_5, window_bounds = array<i64: 208, 128>}]} {
    %c0_i32 = arith.constant 0 : i32
    %0 = arith.cmpi eq, %arg1, %c0_i32 : i32
    %1 = arith.extui %0 : i1 to i32
    %c0_i32_0 = arith.constant 0 : i32
    %2 = arith.cmpi ne, %1, %c0_i32_0 : i32
    scf.if %2 {
      %cst_18 = arith.constant 0.000000e+00 : f32
      %25 = vector.broadcast %cst_18 : f32 to vector<208x128xf32>
      %c0_19 = arith.constant 0 : index
      %c0_20 = arith.constant 0 : index
      %26 = vector.load %arg6[%c0_19, %c0_20] : memref<1x128xf32, #tpu.memory_space<vmem>>, vector<1x128xf32>
      %27 = vector.broadcast %26 : vector<1x128xf32> to vector<208x128xf32>
      %28 = arith.addf %25, %27 : vector<208x128xf32>
      %c0_21 = arith.constant 0 : index
      %c0_22 = arith.constant 0 : index
      %29 = vector.load %arg8[%c0_21, %c0_22] : memref<208x128xf32, #tpu.memory_space<vmem>>, vector<208x128xf32>
      tpu.vector_store %arg8[%c0_21, %c0_22], %28 {strides = array<i32>} : memref<208x128xf32, #tpu.memory_space<vmem>>, vector<208x128xf32>,
    } else {
    }
    %c0 = arith.constant 0 : index
    %c0_1 = arith.constant 0 : index
    %3 = vector.load %arg2[%c0, %c0_1] : memref<208x128xf32, #tpu.memory_space<vmem>>, vector<208x128xf32>
    %c0_2 = arith.constant 0 : index
    %c0_3 = arith.constant 0 : index
    %4 = vector.load %arg3[%c0_2, %c0_3] : memref<128x256xf32, #tpu.memory_space<vmem>>, vector<128x256xf32>
    %cst = arith.constant dense<0.000000e+00> : vector<208x256xf32>
    %5 = tpu.matmul %3, %4, %cst {dimension_numbers = #tpu.dot_dimension_numbers<[1], [0], [0], [1], [0, 0, 1, 1], [], []>} : vector<208x128xf32>, vector<128x256xf32>, vector<208x256xf32> -> vector<208x256xf32>
    %c0_4 = arith.constant 0 : index
    %c0_5 = arith.constant 0 : index
    %6 = vector.load %arg4[%c0_4, %c0_5] : memref<1x256xf32, #tpu.memory_space<vmem>>, vector<1x256xf32>
    %7 = vector.broadcast %6 : vector<1x256xf32> to vector<208x256xf32>
    %8 = arith.addf %5, %7 : vector<208x256xf32>
    %cst_6 = arith.constant 5.000000e-01 : f32
    %9 = vector.broadcast %cst_6 : f32 to vector<208x256xf32>
    %10 = arith.mulf %9, %8 : vector<208x256xf32>
    %cst_7 = arith.constant 0.707106769 : f32
    %11 = vector.broadcast %cst_7 : f32 to vector<208x256xf32>
    %12 = arith.mulf %8, %11 : vector<208x256xf32>
    %13 = math.erf %12 : vector<208x256xf32>
    %cst_8 = arith.constant 1.000000e+00 : f32
    %14 = vector.broadcast %cst_8 : f32 to vector<208x256xf32>
    %15 = arith.addf %14, %13 : vector<208x256xf32>
    %16 = arith.mulf %10, %15 : vector<208x256xf32>
    %c0_9 = arith.constant 0 : index
    %c0_10 = arith.constant 0 : index
    %17 = vector.load %arg8[%c0_9, %c0_10] : memref<208x128xf32, #tpu.memory_space<vmem>>, vector<208x128xf32>
    %c0_11 = arith.constant 0 : index
    %c0_12 = arith.constant 0 : index
    %18 = vector.load %arg5[%c0_11, %c0_12] : memref<256x128xf32, #tpu.memory_space<vmem>>, vector<256x128xf32>
    %cst_13 = arith.constant dense<0.000000e+00> : vector<208x128xf32>
    %19 = tpu.matmul %16, %18, %cst_13 {dimension_numbers = #tpu.dot_dimension_numbers<[1], [0], [0], [1], [0, 0, 1, 1], [], []>} : vector<208x256xf32>, vector<256x128xf32>, vector<208x128xf32> -> vector<208x128xf32>
    %20 = arith.addf %17, %19 : vector<208x128xf32>
    %c0_14 = arith.constant 0 : index
    %c0_15 = arith.constant 0 : index
    %21 = vector.load %arg8[%c0_14, %c0_15] : memref<208x128xf32, #tpu.memory_space<vmem>>, vector<208x128xf32>
    tpu.vector_store %arg8[%c0_14, %c0_15], %20 {strides = array<i32>} : memref<208x128xf32, #tpu.memory_space<vmem>>, vector<208x128xf32>,
    %c0_i32_16 = arith.constant 0 : i32
    %22 = arith.cmpi eq, %arg1, %c0_i32_16 : i32
    %23 = arith.extui %22 : i1 to i32
    %c0_i32_17 = arith.constant 0 : i32
    %24 = arith.cmpi ne, %23, %c0_i32_17 : i32
    scf.if %24 {
      %c0_18 = arith.constant 0 : index
      %c0_19 = arith.constant 0 : index
      %25 = vector.load %arg8[%c0_18, %c0_19] : memref<208x128xf32, #tpu.memory_space<vmem>>, vector<208x128xf32>
      %c0_20 = arith.constant 0 : index
      %c0_21 = arith.constant 0 : index
      %26 = vector.load %arg7[%c0_20, %c0_21] : memref<208x128xf32, #tpu.memory_space<vmem>>, vector<208x128xf32>
      tpu.vector_store %arg7[%c0_20, %c0_21], %25 {strides = array<i32>} : memref<208x128xf32, #tpu.memory_space<vmem>>, vector<208x128xf32>,
    } else {
    }
    return
  }
  func.func @transform_0(%arg0: i32, %arg1: i32) -> (i32, i32) {
    %c0_i32 = arith.constant 0 : i32
    %c0_i32_0 = arith.constant 0 : i32
    return %arg0, %c0_i32 : i32, i32
  }
  func.func @transform_1(%arg0: i32, %arg1: i32) -> (i32, i32) {
    %c0_i32 = arith.constant 0 : i32
    %c0_i32_0 = arith.constant 0 : i32
    return %c0_i32, %arg1 : i32, i32
  }
  func.func @transform_2(%arg0: i32, %arg1: i32) -> (i32, i32) {
    %c0_i32 = arith.constant 0 : i32
    %c0_i32_0 = arith.constant 0 : i32
    return %c0_i32, %arg1 : i32, i32
  }
  func.func @transform_3(%arg0: i32, %arg1: i32) -> (i32, i32) {
    %c0_i32 = arith.constant 0 : i32
    %c0_i32_0 = arith.constant 0 : i32
    return %arg1, %c0_i32 : i32, i32
  }
  func.func @transform_4(%arg0: i32, %arg1: i32) -> (i32, i32) {
    %c0_i32 = arith.constant 0 : i32
    %c0_i32_0 = arith.constant 0 : i32
    %c0_i32_1 = arith.constant 0 : i32
    return %c0_i32, %c0_i32_0 : i32, i32
  }
  func.func @transform_5(%arg0: i32, %arg1: i32) -> (i32, i32) {
    %c0_i32 = arith.constant 0 : i32
    %c0_i32_0 = arith.constant 0 : i32
    return %arg0, %c0_i32 : i32, i32
  }
}

module attributes {stable_mosaic.version = 11 : i64} {
  func.func @mlp_kernel(%arg0: i32, %arg1: i32, %arg2: memref<208x128xf32, #tpu.memory_space<vmem>>, %arg3: memref<128x256xf32, #tpu.memory_space<vmem>>, %arg4: memref<1x256xf32, #tpu.memory_space<vmem>>, %arg5: memref<256x128xf32, #tpu.memory_space<vmem>>, %arg6: memref<1x128xf32, #tpu.memory_space<vmem>>, %arg7: memref<208x128xf32, #tpu.memory_space<vmem>>, %arg8: memref<208x128xf32, #tpu.memory_space<vmem>>) attributes {dimension_semantics = [#tpu.dimension_semantics<parallel>, #tpu.dimension_semantics<arbitrary>], iteration_bounds = array<i64: 1, 1>, scalar_prefetch = 0 : i64, scratch_operands = 1 : i64, tpu.core_type = #tpu.core_type<tc>, window_params = [{transform_indices = @transform_0, window_bounds = array<i64: 208, 128>}, {transform_indices = @transform_1, window_bounds = array<i64: 128, 256>}, {transform_indices = @transform_2, window_bounds = array<i64: 1, 256>}, {transform_indices = @transform_3, window_bounds = array<i64: 256, 128>}, {pipeline_mode = #tpu.pipeline_mode<synchronous>, transform_indices = @transform_4, window_bounds = array<i64: 1, 128>}, {transform_indices = @transform_5, window_bounds = array<i64: 208, 128>}]} {
    %c0_i32 = arith.constant 0 : i32
    %0 = arith.cmpi eq, %arg1, %c0_i32 : i32
    %1 = arith.extui %0 : i1 to i32
    %c0_i32_0 = arith.constant 0 : i32
    %2 = arith.cmpi ne, %1, %c0_i32_0 : i32
    scf.if %2 {
      %cst_18 = arith.constant 0.000000e+00 : f32
      %25 = vector.broadcast %cst_18 : f32 to vector<208x128xf32>
      %c0_19 = arith.constant 0 : index
      %c0_20 = arith.constant 0 : index
      %26 = vector.load %arg6[%c0_19, %c0_20] : memref<1x128xf32, #tpu.memory_space<vmem>>, vector<1x128xf32>
      %27 = vector.broadcast %26 : vector<1x128xf32> to vector<208x128xf32>
      %28 = arith.addf %25, %27 : vector<208x128xf32>
      %c0_21 = arith.constant 0 : index
      %c0_22 = arith.constant 0 : index
      %29 = vector.load %arg8[%c0_21, %c0_22] : memref<208x128xf32, #tpu.memory_space<vmem>>, vector<208x128xf32>
      tpu.vector_store %arg8[%c0_21, %c0_22], %28 {strides = array<i32>} : memref<208x128xf32, #tpu.memory_space<vmem>>, vector<208x128xf32>,
    } else {
    }
    %c0 = arith.constant 0 : index
    %c0_1 = arith.constant 0 : index
    %3 = vector.load %arg2[%c0, %c0_1] : memref<208x128xf32, #tpu.memory_space<vmem>>, vector<208x128xf32>
    %c0_2 = arith.constant 0 : index
    %c0_3 = arith.constant 0 : index
    %4 = vector.load %arg3[%c0_2, %c0_3] : memref<128x256xf32, #tpu.memory_space<vmem>>, vector<128x256xf32>
    %cst = arith.constant dense<0.000000e+00> : vector<208x256xf32>
    %5 = tpu.matmul %3, %4, %cst {dimension_numbers = #tpu.dot_dimension_numbers<[1], [0], [0], [1], [0, 0, 1, 1], [], []>} : vector<208x128xf32>, vector<128x256xf32>, vector<208x256xf32> -> vector<208x256xf32>
    %c0_4 = arith.constant 0 : index
    %c0_5 = arith.constant 0 : index
    %6 = vector.load %arg4[%c0_4, %c0_5] : memref<1x256xf32, #tpu.memory_space<vmem>>, vector<1x256xf32>
    %7 = vector.broadcast %6 : vector<1x256xf32> to vector<208x256xf32>
    %8 = arith.addf %5, %7 : vector<208x256xf32>
    %cst_6 = arith.constant 5.000000e-01 : f32
    %9 = vector.broadcast %cst_6 : f32 to vector<208x256xf32>
    %10 = arith.mulf %9, %8 : vector<208x256xf32>
    %cst_7 = arith.constant 0.707106769 : f32
    %11 = vector.broadcast %cst_7 : f32 to vector<208x256xf32>
    %12 = arith.mulf %8, %11 : vector<208x256xf32>
    %13 = math.erf %12 : vector<208x256xf32>
    %cst_8 = arith.constant 1.000000e+00 : f32
    %14 = vector.broadcast %cst_8 : f32 to vector<208x256xf32>
    %15 = arith.addf %14, %13 : vector<208x256xf32>
    %16 = arith.mulf %10, %15 : vector<208x256xf32>
    %c0_9 = arith.constant 0 : index
    %c0_10 = arith.constant 0 : index
    %17 = vector.load %arg8[%c0_9, %c0_10] : memref<208x128xf32, #tpu.memory_space<vmem>>, vector<208x128xf32>
    %c0_11 = arith.constant 0 : index
    %c0_12 = arith.constant 0 : index
    %18 = vector.load %arg5[%c0_11, %c0_12] : memref<256x128xf32, #tpu.memory_space<vmem>>, vector<256x128xf32>
    %cst_13 = arith.constant dense<0.000000e+00> : vector<208x128xf32>
    %19 = tpu.matmul %16, %18, %cst_13 {dimension_numbers = #tpu.dot_dimension_numbers<[1], [0], [0], [1], [0, 0, 1, 1], [], []>} : vector<208x256xf32>, vector<256x128xf32>, vector<208x128xf32> -> vector<208x128xf32>
    %20 = arith.addf %17, %19 : vector<208x128xf32>
    %c0_14 = arith.constant 0 : index
    %c0_15 = arith.constant 0 : index
    %21 = vector.load %arg8[%c0_14, %c0_15] : memref<208x128xf32, #tpu.memory_space<vmem>>, vector<208x128xf32>
    tpu.vector_store %arg8[%c0_14, %c0_15], %20 {strides = array<i32>} : memref<208x128xf32, #tpu.memory_space<vmem>>, vector<208x128xf32>,
    %c0_i32_16 = arith.constant 0 : i32
    %22 = arith.cmpi eq, %arg1, %c0_i32_16 : i32
    %23 = arith.extui %22 : i1 to i32
    %c0_i32_17 = arith.constant 0 : i32
    %24 = arith.cmpi ne, %23, %c0_i32_17 : i32
    scf.if %24 {
      %c0_18 = arith.constant 0 : index
      %c0_19 = arith.constant 0 : index
      %25 = vector.load %arg8[%c0_18, %c0_19] : memref<208x128xf32, #tpu.memory_space<vmem>>, vector<208x128xf32>
      %c0_20 = arith.constant 0 : index
      %c0_21 = arith.constant 0 : index
      %26 = vector.load %arg7[%c0_20, %c0_21] : memref<208x128xf32, #tpu.memory_space<vmem>>, vector<208x128xf32>
      tpu.vector_store %arg7[%c0_20, %c0_21], %25 {strides = array<i32>} : memref<208x128xf32, #tpu.memory_space<vmem>>, vector<208x128xf32>,
    } else {
    }
    return
  }
  func.func @transform_0(%arg0: i32, %arg1: i32) -> (i32, i32) {
    %c0_i32 = arith.constant 0 : i32
    %c0_i32_0 = arith.constant 0 : i32
    return %arg0, %c0_i32 : i32, i32
  }
  func.func @transform_1(%arg0: i32, %arg1: i32) -> (i32, i32) {
    %c0_i32 = arith.constant 0 : i32
    %c0_i32_0 = arith.constant 0 : i32
    return %c0_i32, %arg1 : i32, i32
  }
  func.func @transform_2(%arg0: i32, %arg1: i32) -> (i32, i32) {
    %c0_i32 = arith.constant 0 : i32
    %c0_i32_0 = arith.constant 0 : i32
    return %c0_i32, %arg1 : i32, i32
  }
  func.func @transform_3(%arg0: i32, %arg1: i32) -> (i32, i32) {
    %c0_i32 = arith.constant 0 : i32
    %c0_i32_0 = arith.constant 0 : i32
    return %arg1, %c0_i32 : i32, i32
  }
  func.func @transform_4(%arg0: i32, %arg1: i32) -> (i32, i32) {
    %c0_i32 = arith.constant 0 : i32
    %c0_i32_0 = arith.constant 0 : i32
    %c0_i32_1 = arith.constant 0 : i32
    return %c0_i32, %c0_i32_0 : i32, i32
  }
  func.func @transform_5(%arg0: i32, %arg1: i32) -> (i32, i32) {
    %c0_i32 = arith.constant 0 : i32
    %c0_i32_0 = arith.constant 0 : i32
    return %arg0, %c0_i32 : i32, i32
  }
}

</mosaic_0001>

<llo_original>
// kernel: tpu_custom_call.1
$region0: #{tpu_custom_call.1}
  #allocation0 [shape = 'u32[]', space=smem, size = 0x4, offset = 0x4, fixed_abs, tag = 'smem constant byte address 0x4 - core index']
  #allocation1 [shape = 'u32[144,128]{1,0:T(1,128)}', space=vmem, size = 0x12000, scoped, tag = 'internal scratch']
  #allocation2 [shape = 'f32[208,128]{1,0:T(8,128)}', space=vmem, size = 0x1a000, scoped, tag = 'scratch operand']
  %s0 = inlined_call_operand.hbm [shape: f32[208,128], index: 0, kind: input, shape index: {}]
  %s1 = inlined_call_operand.hbm [shape: f32[128,256], index: 1, kind: input, shape index: {}]
  %s2 = inlined_call_operand.vmem [shape: f32[1,256], index: 2, kind: input, shape index: {}]
  %s3 = inlined_call_operand.hbm [shape: f32[256,128], index: 3, kind: input, shape index: {}]
  %s4 = inlined_call_operand.vmem [shape: f32[1,128], index: 4, kind: input, shape index: {}]
  %s5 = inlined_call_operand.hbm [shape: f32[208,128], index: 5, kind: output, shape index: {}]
  %s6 = sld [smem:[#allocation0]]
  $region50: #{tpu_custom_call.1} parent=0
    _
  %s8 = ssub.s32 1, %s6
  %s9 = scalar_select 0, %s8, %s6
  $region1: #{tpu_custom_call.1} parent=0
    #allocation3 [shape = 'u8[106496]{0}', space=vmem, size = 0x1a000, scoped, tag = 'input window, operand 0, single buffered']
    #allocation4 [shape = 's32[1]{0}', space=sflag, size = 0x4, scoped, tag = 'scoped memory for tpu_custom_call.1']
    #allocation5 [shape = 's32[1]{0}', space=sflag, size = 0x4, scoped, tag = 'scoped memory for tpu_custom_call.1']
    #allocation6 [shape = 'u8[131072]{0}', space=vmem, size = 0x20000, scoped, tag = 'input window, operand 1, single buffered']
    #allocation7 [shape = 's32[1]{0}', space=sflag, size = 0x4, scoped, tag = 'scoped memory for tpu_custom_call.1']
    #allocation8 [shape = 'u8[131072]{0}', space=vmem, size = 0x20000, scoped, tag = 'input window, operand 3, single buffered']
    #allocation9 [shape = 'u8[106496]{0}', space=vmem, size = 0x1a000, scoped, tag = 'output window, operand 0, single buffered']
    %10 = vsyncpa [#allocation4], 0
    %11 = vsyncpa [#allocation7], 0
    %12 = vsyncpa [#allocation5], 0
    // Predicated region
    $region2: #{tpu_custom_call.1} parent=1 // pred_check
      _
    $region3: #{tpu_custom_call.1} parent=1 // pred_check_branch
      %14 = sbr.rel (0) target = $region5
    $region4: #{tpu_custom_call.1} parent=1 // pred_region
      %s16 = ssub.s32 3328, 3328
      %17 = vsyncadd [#allocation4], %s16
      %s18 = sshll.u32 [#allocation3], 4
      %s19 = int_to_ptr.vmem [resolvable:$true] %s18
      %24 = dma.hbm_to_vmem [thread:$0]  %s0, 3328, %s19, [#allocation4], 128, 128, 8
    $region5: #{tpu_custom_call.1} parent=1 // pred_fallthru
      _
    // Predicated region
    $region6: #{tpu_custom_call.1} parent=1 // pred_check
      _
    $region7: #{tpu_custom_call.1} parent=1 // pred_check_branch
      %26 = sbr.rel (0) target = $region9
    $region8: #{tpu_custom_call.1} parent=1 // pred_region
      %s28 = ssub.s32 4096, 4096
      %29 = vsyncadd [#allocation7], %s28
      %s30 = sshll.u32 [#allocation6], 4
      %s31 = int_to_ptr.vmem [resolvable:$true] %s30
      %36 = dma.hbm_to_vmem [thread:$0]  %s1, 4096, %s31, [#allocation7], 256, 256, 16
    $region9: #{tpu_custom_call.1} parent=1 // pred_fallthru
      _
    // Predicated region
    $region10: #{tpu_custom_call.1} parent=1 // pred_check
      _
    $region11: #{tpu_custom_call.1} parent=1 // pred_check_branch
      %38 = sbr.rel (0) target = $region13
    $region12: #{tpu_custom_call.1} parent=1 // pred_region
      _
    $region13: #{tpu_custom_call.1} parent=1 // pred_fallthru
      _
    // Predicated region
    $region14: #{tpu_custom_call.1} parent=1 // pred_check
      _
    $region15: #{tpu_custom_call.1} parent=1 // pred_check_branch
      %40 = sbr.rel (0) target = $region17
    $region16: #{tpu_custom_call.1} parent=1 // pred_region
      %s42 = ssub.s32 4096, 4096
      %43 = vsyncadd [#allocation7], %s42
      %s44 = sshll.u32 [#allocation8], 4
      %s45 = int_to_ptr.vmem [resolvable:$true] %s44
      %50 = dma.hbm_to_vmem [thread:$0]  %s3, 4096, %s45, [#allocation7], 128, 128, 8
    $region17: #{tpu_custom_call.1} parent=1 // pred_fallthru
      _
    // Predicated region
    $region18: #{tpu_custom_call.1} parent=1 // pred_check
      _
    $region19: #{tpu_custom_call.1} parent=1 // pred_check_branch
      %52 = sbr.rel (0) target = $region21
    $region20: #{tpu_custom_call.1} parent=1 // pred_region
      _
    $region21: #{tpu_custom_call.1} parent=1 // pred_fallthru
      _
    // Predicated region
    $region22: #{tpu_custom_call.1} parent=1 // pred_check
      _
    $region23: #{tpu_custom_call.1} parent=1 // pred_check_branch
      %54 = sbr.rel (0) target = $region25
    $region24: #{tpu_custom_call.1} parent=1 // pred_region
      %55 = dma.done [#allocation4], 3328
    $region25: #{tpu_custom_call.1} parent=1 // pred_fallthru
      _
    // Predicated region
    $region26: #{tpu_custom_call.1} parent=1 // pred_check
      _
    $region27: #{tpu_custom_call.1} parent=1 // pred_check_branch
      %57 = sbr.rel (0) target = $region29
    $region28: #{tpu_custom_call.1} parent=1 // pred_region
      %58 = dma.done [#allocation7], 4096
    $region29: #{tpu_custom_call.1} parent=1 // pred_fallthru
      _
    // Predicated region
    $region30: #{tpu_custom_call.1} parent=1 // pred_check
      _
    $region31: #{tpu_custom_call.1} parent=1 // pred_check_branch
      %60 = sbr.rel (0) target = $region33
    $region32: #{tpu_custom_call.1} parent=1 // pred_region
      %61 = dma.done [#allocation7], 4096
    $region33: #{tpu_custom_call.1} parent=1 // pred_fallthru
      _
    %p62 = scmp.eq.s32.totalorder 0, 0
    // Predicated region
    $region34: #{tpu_custom_call.1} parent=1 // pred_check
      %p63 = pneg %p62
    $region35: #{tpu_custom_call.1} parent=1 // pred_check_branch
      %65 = sbr.rel (%p63) target = $region37
    $region36: #{tpu_custom_call.1} parent=1 // pred_region
      %v66 = vld [vmem:[%s4] sm:$0x1]
      %v68 = vlaneseq
      %v69 = vshrl.u32 %v68, 7
      %v70 = vsub.s32 0, %v69
      %v71 = vrot.slane %v66, %v70
      %v73 = vadd.f32 %v71, 0.0
      %74 = vst [vmem:[#allocation2] sm:$0xff] %v73
      %75 = vst [vmem:[#allocation2 + $0x8] sm:$0xff] %v73
      %76 = vst [vmem:[#allocation2 + $0x10] sm:$0xff] %v73
      %77 = vst [vmem:[#allocation2 + $0x18] sm:$0xff] %v73
      %78 = vst [vmem:[#allocation2 + $0x20] sm:$0xff] %v73
      %79 = vst [vmem:[#allocation2 + $0x28] sm:$0xff] %v73
      %80 = vst [vmem:[#allocation2 + $0x30] sm:$0xff] %v73
      %81 = vst [vmem:[#allocation2 + $0x38] sm:$0xff] %v73
      %82 = vst [vmem:[#allocation2 + $0x40] sm:$0xff] %v73
      %83 = vst [vmem:[#allocation2 + $0x48] sm:$0xff] %v73
      %84 = vst [vmem:[#allocation2 + $0x50] sm:$0xff] %v73
      %85 = vst [vmem:[#allocation2 + $0x58] sm:$0xff] %v73
      %86 = vst [vmem:[#allocation2 + $0x60] sm:$0xff] %v73
      %87 = vst [vmem:[#allocation2 + $0x68] sm:$0xff] %v73
      %88 = vst [vmem:[#allocation2 + $0x70] sm:$0xff] %v73
      %89 = vst [vmem:[#allocation2 + $0x78] sm:$0xff] %v73
      %90 = vst [vmem:[#allocation2 + $0x80] sm:$0xff] %v73
      %91 = vst [vmem:[#allocation2 + $0x88] sm:$0xff] %v73
      %92 = vst [vmem:[#allocation2 + $0x90] sm:$0xff] %v73
      %93 = vst [vmem:[#allocation2 + $0x98] sm:$0xff] %v73
      %94 = vst [vmem:[#allocation2 + $0xa0] sm:$0xff] %v73
      %95 = vst [vmem:[#allocation2 + $0xa8] sm:$0xff] %v73
      %96 = vst [vmem:[#allocation2 + $0xb0] sm:$0xff] %v73
      %97 = vst [vmem:[#allocation2 + $0xb8] sm:$0xff] %v73
      %98 = vst [vmem:[#allocation2 + $0xc0] sm:$0xff] %v73
      %99 = vst [vmem:[#allocation2 + $0xc8] sm:$0xff] %v73
    $region37: #{tpu_custom_call.1} parent=1 // pred_fallthru
      _
    %v100 = vld [vmem:[#allocation3] sm:$0xff]
    %v101 = vld [vmem:[#allocation3 + $0x8] sm:$0xff]
    %v102 = vld [vmem:[#allocation3 + $0x10] sm:$0xff]
    %v103 = vld [vmem:[#allocation3 + $0x18] sm:$0xff]
    %v104 = vld [vmem:[#allocation3 + $0x20] sm:$0xff]
    %v105 = vld [vmem:[#allocation3 + $0x28] sm:$0xff]
    %v106 = vld [vmem:[#allocation3 + $0x30] sm:$0xff]
    %v107 = vld [vmem:[#allocation3 + $0x38] sm:$0xff]
    %v108 = vld [vmem:[#allocation3 + $0x40] sm:$0xff]
    %v109 = vld [vmem:[#allocation3 + $0x48] sm:$0xff]
    %v110 = vld [vmem:[#allocation3 + $0x50] sm:$0xff]
    %v111 = vld [vmem:[#allocation3 + $0x58] sm:$0xff]
    %v112 = vld [vmem:[#allocation3 + $0x60] sm:$0xff]
    %v113 = vld [vmem:[#allocation3 + $0x68] sm:$0xff]
    %v114 = vld [vmem:[#allocation3 + $0x70] sm:$0xff]
    %v115 = vld [vmem:[#allocation3 + $0x78] sm:$0xff]
    %v116 = vld [vmem:[#allocation3 + $0x80] sm:$0xff]
    %v117 = vld [vmem:[#allocation3 + $0x88] sm:$0xff]
    %v118 = vld [vmem:[#allocation3 + $0x90] sm:$0xff]
    %v119 = vld [vmem:[#allocation3 + $0x98] sm:$0xff]
    %v120 = vld [vmem:[#allocation3 + $0xa0] sm:$0xff]
    %v121 = vld [vmem:[#allocation3 + $0xa8] sm:$0xff]
    %v122 = vld [vmem:[#allocation3 + $0xb0] sm:$0xff]
    %v123 = vld [vmem:[#allocation3 + $0xb8] sm:$0xff]
    %v124 = vld [vmem:[#allocation3 + $0xc0] sm:$0xff]
    %v125 = vld [vmem:[#allocation3 + $0xc8] sm:$0xff]
    %v126 = vld [vmem:[#allocation6] sm:$0xff]
    %v127 = vld [vmem:[#allocation6 + $0x8] sm:$0xff]
    %v128 = vld [vmem:[#allocation6 + $0x10] sm:$0xff]
    %v129 = vld [vmem:[#allocation6 + $0x18] sm:$0xff]
    %v130 = vld [vmem:[#allocation6 + $0x20] sm:$0xff]
    %v131 = vld [vmem:[#allocation6 + $0x28] sm:$0xff]
    %v132 = vld [vmem:[#allocation6 + $0x30] sm:$0xff]
    %v133 = vld [vmem:[#allocation6 + $0x38] sm:$0xff]
    %v134 = vld [vmem:[#allocation6 + $0x40] sm:$0xff]
    %v135 = vld [vmem:[#allocation6 + $0x48] sm:$0xff]
    %v136 = vld [vmem:[#allocation6 + $0x50] sm:$0xff]
    %v137 = vld [vmem:[#allocation6 + $0x58] sm:$0xff]
    %v138 = vld [vmem:[#allocation6 + $0x60] sm:$0xff]
    %v139 = vld [vmem:[#allocation6 + $0x68] sm:$0xff]
    %v140 = vld [vmem:[#allocation6 + $0x70] sm:$0xff]
    %v141 = vld [vmem:[#allocation6 + $0x78] sm:$0xff]
    %v142 = vld [vmem:[#allocation6 + $0x80] sm:$0xff]
    %v143 = vld [vmem:[#allocation6 + $0x88] sm:$0xff]
    %v144 = vld [vmem:[#allocation6 + $0x90] sm:$0xff]
    %v145 = vld [vmem:[#allocation6 + $0x98] sm:$0xff]
    %v146 = vld [vmem:[#allocation6 + $0xa0] sm:$0xff]
    %v147 = vld [vmem:[#allocation6 + $0xa8] sm:$0xff]
    %v148 = vld [vmem:[#allocation6 + $0xb0] sm:$0xff]
    %v149 = vld [vmem:[#allocation6 + $0xb8] sm:$0xff]
    %v150 = vld [vmem:[#allocation6 + $0xc0] sm:$0xff]
    %v151 = vld [vmem:[#allocation6 + $0xc8] sm:$0xff]
    %v152 = vld [vmem:[#allocation6 + $0xd0] sm:$0xff]
    %v153 = vld [vmem:[#allocation6 + $0xd8] sm:$0xff]
    %v154 = vld [vmem:[#allocation6 + $0xe0] sm:$0xff]
    %v155 = vld [vmem:[#allocation6 + $0xe8] sm:$0xff]
    %v156 = vld [vmem:[#allocation6 + $0xf0] sm:$0xff]
    %v157 = vld [vmem:[#allocation6 + $0xf8] sm:$0xff]
    %v158 = vld [vmem:[%s2] sm:$0x3]
    %v160 = vlaneseq
    %v161 = vshrl.u32 %v160, 7
    %v162 = vsub.s32 0, %v161
    %v163 = vrot.slane %v158, %v162
    %v164 = vlaneseq
    %v165 = vshrl.u32 %v164, 7
    %v166 = vsub.s32 1, %v165
    %v167 = vrot.slane %v158, %v166
    %170 = vmatprep.subr.mxu0 %v157
    %171 = vmatpush1.msra.mxu0 %v156
    %172 = vmatprep.subr.mxu0 %v155
    %173 = vmatpush1.msra.mxu0 %v154
    %174 = vmatprep.subr.mxu0 %v153
    %175 = vmatpush1.msra.mxu0 %v152
    %176 = vmatprep.subr.mxu0 %v151
    %177 = vmatpush1.msra.mxu0 %v150
    %178 = vmatprep.subr.mxu0 %v149
    %179 = vmatpush1.msra.mxu0 %v148
    %180 = vmatprep.subr.mxu0 %v147
    %181 = vmatpush1.msra.mxu0 %v146
    %182 = vmatprep.subr.mxu0 %v145
    %183 = vmatpush1.msra.mxu0 %v144
    %184 = vmatprep.subr.mxu0 %v143
    %185 = vmatpush1.msra.mxu0 %v142
    %186 = vmatprep.subr.mxu0 %v141
    %187 = vmatpush1.msra.mxu0 %v140
    %188 = vmatprep.subr.mxu0 %v139
    %189 = vmatpush1.msra.mxu0 %v138
    %190 = vmatprep.subr.mxu0 %v137
    %191 = vmatpush1.msra.mxu0 %v136
    %192 = vmatprep.subr.mxu0 %v135
    %193 = vmatpush1.msra.mxu0 %v134
    %194 = vmatprep.subr.mxu0 %v133
    %195 = vmatpush1.msra.mxu0 %v132
    %196 = vmatprep.subr.mxu0 %v131
    %197 = vmatpush1.msra.mxu0 %v130
    %198 = vmatprep.subr.mxu0 %v129
    %199 = vmatpush1.msra.mxu0 %v128
    %200 = vmatprep.subr.mxu0 %v127
    %201 = vmatpush1.msra.mxu0 %v126
    %202 = vmatprep.subr.mxu0 0.0
    %203 = vmatpush2.msra.mxu0 0.0
    %204 = vmatprep.subr.mxu0 0.0
    %205 = vmatpush2.msra.mxu0 0.0
    %206 = vmatprep.subr.mxu0 0.0
    %207 = vmatpush2.msra.mxu0 0.0
    %208 = vmatprep.subr.mxu0 0.0
    %209 = vmatpush2.msra.mxu0 0.0
    %210 = vmatprep.subr.mxu0 0.0
    %211 = vmatpush2.msra.mxu0 0.0
    %212 = vmatprep.subr.mxu0 0.0
    %213 = vmatpush2.msra.mxu0 0.0
    %214 = vmatprep.subr.mxu0 0.0
    %215 = vmatpush2.msra.mxu0 0.0
    %216 = vmatprep.subr.mxu0 0.0
    %217 = vmatpush2.msra.mxu0 0.0
    %218 = vmatprep.subr.mxu0 0.0
    %219 = vmatpush2.msra.mxu0 0.0
    %220 = vmatprep.subr.mxu0 0.0
    %221 = vmatpush2.msra.mxu0 0.0
    %222 = vmatprep.subr.mxu0 0.0
    %223 = vmatpush2.msra.mxu0 0.0
    %224 = vmatprep.subr.mxu0 0.0
    %225 = vmatpush2.msra.mxu0 0.0
    %226 = vmatprep.subr.mxu0 0.0
    %227 = vmatpush2.msra.mxu0 0.0
    %228 = vmatprep.subr.mxu0 0.0
    %229 = vmatpush2.msra.mxu0 0.0
    %230 = vmatprep.subr.mxu0 0.0
    %231 = vmatpush2.msra.mxu0 0.0
    %232 = vmatprep.subr.mxu0 0.0
    %233 = vmatpush2.msra.mxu0 0.0
    %234 = vmatprep.mubr.f32.mxu0 0.0
    %235 = vmatmul.mubr.f32.gmra.mxu0 %v100
    %v236 = vpop.f32.mrf.mxu0
    %v237 = vadd.f32 %v163, %v236
    %v238 = vpop.f32.mrf.mxu0
    %v239 = vadd.f32 %v167, %v238
    %240 = vmatprep.mubr.f32.mxu0 0.0
    %241 = vmatmul.mubr.f32.gmra.mxu0 %v101
    %v242 = vpop.f32.mrf.mxu0
    %v243 = vadd.f32 %v163, %v242
    %v244 = vpop.f32.mrf.mxu0
    %v245 = vadd.f32 %v167, %v244
    %246 = vmatprep.mubr.f32.mxu0 0.0
    %247 = vmatmul.mubr.f32.gmra.mxu0 %v102
    %v248 = vpop.f32.mrf.mxu0
    %v249 = vadd.f32 %v163, %v248
    %v250 = vpop.f32.mrf.mxu0
    %v251 = vadd.f32 %v167, %v250
    %252 = vmatprep.mubr.f32.mxu0 0.0
    %253 = vmatmul.mubr.f32.gmra.mxu0 %v103
    %v254 = vpop.f32.mrf.mxu0
    %v255 = vadd.f32 %v163, %v254
    %v256 = vpop.f32.mrf.mxu0
    %v257 = vadd.f32 %v167, %v256
    %258 = vmatprep.mubr.f32.mxu0 0.0
    %259 = vmatmul.mubr.f32.gmra.mxu0 %v104
    %v260 = vpop.f32.mrf.mxu0
    %v261 = vadd.f32 %v163, %v260
    %v262 = vpop.f32.mrf.mxu0
    %v263 = vadd.f32 %v167, %v262
    %264 = vmatprep.mubr.f32.mxu0 0.0
    %265 = vmatmul.mubr.f32.gmra.mxu0 %v105
    %v266 = vpop.f32.mrf.mxu0
    %v267 = vadd.f32 %v163, %v266
    %v268 = vpop.f32.mrf.mxu0
    %v269 = vadd.f32 %v167, %v268
    %270 = vmatprep.mubr.f32.mxu0 0.0
    %271 = vmatmul.mubr.f32.gmra.mxu0 %v106
    %v272 = vpop.f32.mrf.mxu0
    %v273 = vadd.f32 %v163, %v272
    %v274 = vpop.f32.mrf.mxu0
    %v275 = vadd.f32 %v167, %v274
    %276 = vmatprep.mubr.f32.mxu0 0.0
    %277 = vmatmul.mubr.f32.gmra.mxu0 %v107
    %v278 = vpop.f32.mrf.mxu0
    %v279 = vadd.f32 %v163, %v278
    %v280 = vpop.f32.mrf.mxu0
    %v281 = vadd.f32 %v167, %v280
    %282 = vmatprep.mubr.f32.mxu0 0.0
    %283 = vmatmul.mubr.f32.gmra.mxu0 %v108
    %v284 = vpop.f32.mrf.mxu0
    %v285 = vadd.f32 %v163, %v284
    %v286 = vpop.f32.mrf.mxu0
    %v287 = vadd.f32 %v167, %v286
    %288 = vmatprep.mubr.f32.mxu0 0.0
    %289 = vmatmul.mubr.f32.gmra.mxu0 %v109
    %v290 = vpop.f32.mrf.mxu0
    %v291 = vadd.f32 %v163, %v290
    %v292 = vpop.f32.mrf.mxu0
    %v293 = vadd.f32 %v167, %v292
    %294 = vmatprep.mubr.f32.mxu0 0.0
    %295 = vmatmul.mubr.f32.gmra.mxu0 %v110
    %v296 = vpop.f32.mrf.mxu0
    %v297 = vadd.f32 %v163, %v296
    %v298 = vpop.f32.mrf.mxu0
    %v299 = vadd.f32 %v167, %v298
    %300 = vmatprep.mubr.f32.mxu0 0.0
    %301 = vmatmul.mubr.f32.gmra.mxu0 %v111
    %v302 = vpop.f32.mrf.mxu0
    %v303 = vadd.f32 %v163, %v302
    %v304 = vpop.f32.mrf.mxu0
    %v305 = vadd.f32 %v167, %v304
    %306 = vmatprep.mubr.f32.mxu0 0.0
    %307 = vmatmul.mubr.f32.gmra.mxu0 %v112
    %v308 = vpop.f32.mrf.mxu0
    %v309 = vadd.f32 %v163, %v308
    %v310 = vpop.f32.mrf.mxu0
    %v311 = vadd.f32 %v167, %v310
    %312 = vmatprep.mubr.f32.mxu0 0.0
    %313 = vmatmul.mubr.f32.gmra.mxu0 %v113
    %v314 = vpop.f32.mrf.mxu0
    %v315 = vadd.f32 %v163, %v314
    %v316 = vpop.f32.mrf.mxu0
    %v317 = vadd.f32 %v167, %v316
    %318 = vmatprep.mubr.f32.mxu0 0.0
    %319 = vmatmul.mubr.f32.gmra.mxu0 %v114
    %v320 = vpop.f32.mrf.mxu0
    %v321 = vadd.f32 %v163, %v320
    %v322 = vpop.f32.mrf.mxu0
    %v323 = vadd.f32 %v167, %v322
    %324 = vmatprep.mubr.f32.mxu0 0.0
    %325 = vmatmul.mubr.f32.gmra.mxu0 %v115
    %v326 = vpop.f32.mrf.mxu0
    %v327 = vadd.f32 %v163, %v326
    %v328 = vpop.f32.mrf.mxu0
    %v329 = vadd.f32 %v167, %v328
    %330 = vmatprep.mubr.f32.mxu0 0.0
    %331 = vmatmul.mubr.f32.gmra.mxu0 %v116
    %v332 = vpop.f32.mrf.mxu0
    %v333 = vadd.f32 %v163, %v332
    %v334 = vpop.f32.mrf.mxu0
    %v335 = vadd.f32 %v167, %v334
    %336 = vmatprep.mubr.f32.mxu0 0.0
    %337 = vmatmul.mubr.f32.gmra.mxu0 %v117
    %v338 = vpop.f32.mrf.mxu0
    %v339 = vadd.f32 %v163, %v338
    %v340 = vpop.f32.mrf.mxu0
    %v341 = vadd.f32 %v167, %v340
    %342 = vmatprep.mubr.f32.mxu0 0.0
    %343 = vmatmul.mubr.f32.gmra.mxu0 %v118
    %v344 = vpop.f32.mrf.mxu0
    %v345 = vadd.f32 %v163, %v344
    %v346 = vpop.f32.mrf.mxu0
    %v347 = vadd.f32 %v167, %v346
    %348 = vmatprep.mubr.f32.mxu0 0.0
    %349 = vmatmul.mubr.f32.gmra.mxu0 %v119
    %v350 = vpop.f32.mrf.mxu0
    %v351 = vadd.f32 %v163, %v350
    %v352 = vpop.f32.mrf.mxu0
    %v353 = vadd.f32 %v167, %v352
    %354 = vmatprep.mubr.f32.mxu0 0.0
    %355 = vmatmul.mubr.f32.gmra.mxu0 %v120
    %v356 = vpop.f32.mrf.mxu0
    %v357 = vadd.f32 %v163, %v356
    %v358 = vpop.f32.mrf.mxu0
    %v359 = vadd.f32 %v167, %v358
    %360 = vmatprep.mubr.f32.mxu0 0.0
    %361 = vmatmul.mubr.f32.gmra.mxu0 %v121
    %v362 = vpop.f32.mrf.mxu0
    %v363 = vadd.f32 %v163, %v362
    %v364 = vpop.f32.mrf.mxu0
    %v365 = vadd.f32 %v167, %v364
    %366 = vmatprep.mubr.f32.mxu0 0.0
    %367 = vmatmul.mubr.f32.gmra.mxu0 %v122
    %v368 = vpop.f32.mrf.mxu0
    %v369 = vadd.f32 %v163, %v368
    %v370 = vpop.f32.mrf.mxu0
    %v371 = vadd.f32 %v167, %v370
    %372 = vmatprep.mubr.f32.mxu0 0.0
    %373 = vmatmul.mubr.f32.gmra.mxu0 %v123
    %v374 = vpop.f32.mrf.mxu0
    %v375 = vadd.f32 %v163, %v374
    %v376 = vpop.f32.mrf.mxu0
    %v377 = vadd.f32 %v167, %v376
    %378 = vmatprep.mubr.f32.mxu0 0.0
    %379 = vmatmul.mubr.f32.gmra.mxu0 %v124
    %v380 = vpop.f32.mrf.mxu0
    %v381 = vadd.f32 %v163, %v380
    %v382 = vpop.f32.mrf.mxu0
    %v383 = vadd.f32 %v167, %v382
    %384 = vmatprep.mubr.f32.mxu0 0.0
    %385 = vmatmul.mubr.f32.gmra.mxu0 %v125
    %v386 = vpop.f32.mrf.mxu0
    %v387 = vadd.f32 %v163, %v386
    %v388 = vpop.f32.mrf.mxu0
    %v389 = vadd.f32 %v167, %v388
    %390 = vdwg.mxu0
    %v391 = vmul.f32 %v237, 0.5
    %v392 = vmul.f32 %v239, 0.5
    %v393 = vmul.f32 %v243, 0.5
    %v394 = vmul.f32 %v245, 0.5
    %v395 = vmul.f32 %v249, 0.5
    %v396 = vmul.f32 %v251, 0.5
    %v397 = vmul.f32 %v255, 0.5
    %v398 = vmul.f32 %v257, 0.5
    %v399 = vmul.f32 %v261, 0.5
    %v400 = vmul.f32 %v263, 0.5
    %v401 = vmul.f32 %v267, 0.5
    %v402 = vmul.f32 %v269, 0.5
    %v403 = vmul.f32 %v273, 0.5
    %v404 = vmul.f32 %v275, 0.5
    %v405 = vmul.f32 %v279, 0.5
    %v406 = vmul.f32 %v281, 0.5
    %v407 = vmul.f32 %v285, 0.5
    %v408 = vmul.f32 %v287, 0.5
    %v409 = vmul.f32 %v291, 0.5
    %v410 = vmul.f32 %v293, 0.5
    %v411 = vmul.f32 %v297, 0.5
    %v412 = vmul.f32 %v299, 0.5
    %v413 = vmul.f32 %v303, 0.5
    %v414 = vmul.f32 %v305, 0.5
    %v415 = vmul.f32 %v309, 0.5
    %v416 = vmul.f32 %v311, 0.5
    %v417 = vmul.f32 %v315, 0.5
    %v418 = vmul.f32 %v317, 0.5
    %v419 = vmul.f32 %v321, 0.5
    %v420 = vmul.f32 %v323, 0.5
    %v421 = vmul.f32 %v327, 0.5
    %v422 = vmul.f32 %v329, 0.5
    %v423 = vmul.f32 %v333, 0.5
    %v424 = vmul.f32 %v335, 0.5
    %v425 = vmul.f32 %v339, 0.5
    %v426 = vmul.f32 %v341, 0.5
    %v427 = vmul.f32 %v345, 0.5
    %v428 = vmul.f32 %v347, 0.5
    %v429 = vmul.f32 %v351, 0.5
    %v430 = vmul.f32 %v353, 0.5
    %v431 = vmul.f32 %v357, 0.5
    %v432 = vmul.f32 %v359, 0.5
    %v433 = vmul.f32 %v363, 0.5
    %v434 = vmul.f32 %v365, 0.5
    %v435 = vmul.f32 %v369, 0.5
    %v436 = vmul.f32 %v371, 0.5
    %v437 = vmul.f32 %v375, 0.5
    %v438 = vmul.f32 %v377, 0.5
    %v439 = vmul.f32 %v381, 0.5
    %v440 = vmul.f32 %v383, 0.5
    %v441 = vmul.f32 %v387, 0.5
    %v442 = vmul.f32 %v389, 0.5
    %v443 = vmul.f32 %v237, 0.70710677
    %v444 = vmul.f32 %v239, 0.70710677
    %v445 = vmul.f32 %v243, 0.70710677
    %v446 = vmul.f32 %v245, 0.70710677
    %v447 = vmul.f32 %v249, 0.70710677
    %v448 = vmul.f32 %v251, 0.70710677
    %v449 = vmul.f32 %v255, 0.70710677
    %v450 = vmul.f32 %v257, 0.70710677
    %v451 = vmul.f32 %v261, 0.70710677
    %v452 = vmul.f32 %v263, 0.70710677
    %v453 = vmul.f32 %v267, 0.70710677
    %v454 = vmul.f32 %v269, 0.70710677
    %v455 = vmul.f32 %v273, 0.70710677
    %v456 = vmul.f32 %v275, 0.70710677
    %v457 = vmul.f32 %v279, 0.70710677
    %v458 = vmul.f32 %v281, 0.70710677
    %v459 = vmul.f32 %v285, 0.70710677
    %v460 = vmul.f32 %v287, 0.70710677
    %v461 = vmul.f32 %v291, 0.70710677
    %v462 = vmul.f32 %v293, 0.70710677
    %v463 = vmul.f32 %v297, 0.70710677
    %v464 = vmul.f32 %v299, 0.70710677
    %v465 = vmul.f32 %v303, 0.70710677
    %v466 = vmul.f32 %v305, 0.70710677
    %v467 = vmul.f32 %v309, 0.70710677
    %v468 = vmul.f32 %v311, 0.70710677
    %v469 = vmul.f32 %v315, 0.70710677
    %v470 = vmul.f32 %v317, 0.70710677
    %v471 = vmul.f32 %v321, 0.70710677
    %v472 = vmul.f32 %v323, 0.70710677
    %v473 = vmul.f32 %v327, 0.70710677
    %v474 = vmul.f32 %v329, 0.70710677
    %v475 = vmul.f32 %v333, 0.70710677
    %v476 = vmul.f32 %v335, 0.70710677
    %v477 = vmul.f32 %v339, 0.70710677
    %v478 = vmul.f32 %v341, 0.70710677
    %v479 = vmul.f32 %v345, 0.70710677
    %v480 = vmul.f32 %v347, 0.70710677
    %v481 = vmul.f32 %v351, 0.70710677
    %v482 = vmul.f32 %v353, 0.70710677
    %v483 = vmul.f32 %v357, 0.70710677
    %v484 = vmul.f32 %v359, 0.70710677
    %v485 = vmul.f32 %v363, 0.70710677
    %v486 = vmul.f32 %v365, 0.70710677
    %v487 = vmul.f32 %v369, 0.70710677
    %v488 = vmul.f32 %v371, 0.70710677
    %v489 = vmul.f32 %v375, 0.70710677
    %v490 = vmul.f32 %v377, 0.70710677
    %v491 = vmul.f32 %v381, 0.70710677
    %v492 = vmul.f32 %v383, 0.70710677
    %v493 = vmul.f32 %v387, 0.70710677
    %v494 = vmul.f32 %v389, 0.70710677
    %v495 = verf.f32.pop %v443
    %v496 = verf.f32.pop %v444
    %v497 = verf.f32.pop %v445
    %v498 = verf.f32.pop %v446
    %v499 = verf.f32.pop %v447
    %v500 = verf.f32.pop %v448
    %v501 = verf.f32.pop %v449
    %v502 = verf.f32.pop %v450
    %v503 = verf.f32.pop %v451
    %v504 = verf.f32.pop %v452
    %v505 = verf.f32.pop %v453
    %v506 = verf.f32.pop %v454
    %v507 = verf.f32.pop %v455
    %v508 = verf.f32.pop %v456
    %v509 = verf.f32.pop %v457
    %v510 = verf.f32.pop %v458
    %v511 = verf.f32.pop %v459
    %v512 = verf.f32.pop %v460
    %v513 = verf.f32.pop %v461
    %v514 = verf.f32.pop %v462
    %v515 = verf.f32.pop %v463
    %v516 = verf.f32.pop %v464
    %v517 = verf.f32.pop %v465
    %v518 = verf.f32.pop %v466
    %v519 = verf.f32.pop %v467
    %v520 = verf.f32.pop %v468
    %v521 = verf.f32.pop %v469
    %v522 = verf.f32.pop %v470
    %v523 = verf.f32.pop %v471
    %v524 = verf.f32.pop %v472
    %v525 = verf.f32.pop %v473
    %v526 = verf.f32.pop %v474
    %v527 = verf.f32.pop %v475
    %v528 = verf.f32.pop %v476
    %v529 = verf.f32.pop %v477
    %v530 = verf.f32.pop %v478
    %v531 = verf.f32.pop %v479
    %v532 = verf.f32.pop %v480
    %v533 = verf.f32.pop %v481
    %v534 = verf.f32.pop %v482
    %v535 = verf.f32.pop %v483
    %v536 = verf.f32.pop %v484
    %v537 = verf.f32.pop %v485
    %v538 = verf.f32.pop %v486
    %v539 = verf.f32.pop %v487
    %v540 = verf.f32.pop %v488
    %v541 = verf.f32.pop %v489
    %v542 = verf.f32.pop %v490
    %v543 = verf.f32.pop %v491
    %v544 = verf.f32.pop %v492
    %v545 = verf.f32.pop %v493
    %v546 = verf.f32.pop %v494
    %v547 = vadd.f32 %v495, 1.0
    %v548 = vadd.f32 %v496, 1.0
    %v549 = vadd.f32 %v497, 1.0
    %v550 = vadd.f32 %v498, 1.0
    %v551 = vadd.f32 %v499, 1.0
    %v552 = vadd.f32 %v500, 1.0
    %v553 = vadd.f32 %v501, 1.0
    %v554 = vadd.f32 %v502, 1.0
    %v555 = vadd.f32 %v503, 1.0
    %v556 = vadd.f32 %v504, 1.0
    %v557 = vadd.f32 %v505, 1.0
    %v558 = vadd.f32 %v506, 1.0
    %v559 = vadd.f32 %v507, 1.0
    %v560 = vadd.f32 %v508, 1.0
    %v561 = vadd.f32 %v509, 1.0
    %v562 = vadd.f32 %v510, 1.0
    %v563 = vadd.f32 %v511, 1.0
    %v564 = vadd.f32 %v512, 1.0
    %v565 = vadd.f32 %v513, 1.0
    %v566 = vadd.f32 %v514, 1.0
    %v567 = vadd.f32 %v515, 1.0
    %v568 = vadd.f32 %v516, 1.0
    %v569 = vadd.f32 %v517, 1.0
    %v570 = vadd.f32 %v518, 1.0
    %v571 = vadd.f32 %v519, 1.0
    %v572 = vadd.f32 %v520, 1.0
    %v573 = vadd.f32 %v521, 1.0
    %v574 = vadd.f32 %v522, 1.0
    %v575 = vadd.f32 %v523, 1.0
    %v576 = vadd.f32 %v524, 1.0
    %v577 = vadd.f32 %v525, 1.0
    %v578 = vadd.f32 %v526, 1.0
    %v579 = vadd.f32 %v527, 1.0
    %v580 = vadd.f32 %v528, 1.0
    %v581 = vadd.f32 %v529, 1.0
    %v582 = vadd.f32 %v530, 1.0
    %v583 = vadd.f32 %v531, 1.0
    %v584 = vadd.f32 %v532, 1.0
    %v585 = vadd.f32 %v533, 1.0
    %v586 = vadd.f32 %v534, 1.0
    %v587 = vadd.f32 %v535, 1.0
    %v588 = vadd.f32 %v536, 1.0
    %v589 = vadd.f32 %v537, 1.0
    %v590 = vadd.f32 %v538, 1.0
    %v591 = vadd.f32 %v539, 1.0
    %v592 = vadd.f32 %v540, 1.0
    %v593 = vadd.f32 %v541, 1.0
    %v594 = vadd.f32 %v542, 1.0
    %v595 = vadd.f32 %v543, 1.0
    %v596 = vadd.f32 %v544, 1.0
    %v597 = vadd.f32 %v545, 1.0
    %v598 = vadd.f32 %v546, 1.0
    %v599 = vmul.f32 %v391, %v547
    %v600 = vmul.f32 %v392, %v548
    %v601 = vmul.f32 %v393, %v549
    %v602 = vmul.f32 %v394, %v550
    %v603 = vmul.f32 %v395, %v551
    %v604 = vmul.f32 %v396, %v552
    %v605 = vmul.f32 %v397, %v553
    %v606 = vmul.f32 %v398, %v554
    %v607 = vmul.f32 %v399, %v555
    %v608 = vmul.f32 %v400, %v556
    %v609 = vmul.f32 %v401, %v557
    %v610 = vmul.f32 %v402, %v558
    %v611 = vmul.f32 %v403, %v559
    %v612 = vmul.f32 %v404, %v560
    %v613 = vmul.f32 %v405, %v561
    %v614 = vmul.f32 %v406, %v562
    %v615 = vmul.f32 %v407, %v563
    %v616 = vmul.f32 %v408, %v564
    %v617 = vmul.f32 %v409, %v565
    %v618 = vmul.f32 %v410, %v566
    %v619 = vmul.f32 %v411, %v567
    %v620 = vmul.f32 %v412, %v568
    %v621 = vmul.f32 %v413, %v569
    %v622 = vmul.f32 %v414, %v570
    %v623 = vmul.f32 %v415, %v571
    %v624 = vmul.f32 %v416, %v572
    %v625 = vmul.f32 %v417, %v573
    %v626 = vmul.f32 %v418, %v574
    %v627 = vmul.f32 %v419, %v575
    %v628 = vmul.f32 %v420, %v576
    %v629 = vmul.f32 %v421, %v577
    %v630 = vmul.f32 %v422, %v578
    %v631 = vmul.f32 %v423, %v579
    %v632 = vmul.f32 %v424, %v580
    %v633 = vmul.f32 %v425, %v581
    %v634 = vmul.f32 %v426, %v582
    %v635 = vmul.f32 %v427, %v583
    %v636 = vmul.f32 %v428, %v584
    %v637 = vmul.f32 %v429, %v585
    %v638 = vmul.f32 %v430, %v586
    %v639 = vmul.f32 %v431, %v587
    %v640 = vmul.f32 %v432, %v588
    %v641 = vmul.f32 %v433, %v589
    %v642 = vmul.f32 %v434, %v590
    %v643 = vmul.f32 %v435, %v591
    %v644 = vmul.f32 %v436, %v592
    %v645 = vmul.f32 %v437, %v593
    %v646 = vmul.f32 %v438, %v594
    %v647 = vmul.f32 %v439, %v595
    %v648 = vmul.f32 %v440, %v596
    %v649 = vmul.f32 %v441, %v597
    %v650 = vmul.f32 %v442, %v598
    %v651 = vld [vmem:[#allocation2] sm:$0xff]
    %v652 = vld [vmem:[#allocation2 + $0x8] sm:$0xff]
    %v653 = vld [vmem:[#allocation2 + $0x10] sm:$0xff]
    %v654 = vld [vmem:[#allocation2 + $0x18] sm:$0xff]
    %v655 = vld [vmem:[#allocation2 + $0x20] sm:$0xff]
    %v656 = vld [vmem:[#allocation2 + $0x28] sm:$0xff]
    %v657 = vld [vmem:[#allocation2 + $0x30] sm:$0xff]
    %v658 = vld [vmem:[#allocation2 + $0x38] sm:$0xff]
    %v659 = vld [vmem:[#allocation2 + $0x40] sm:$0xff]
    %v660 = vld [vmem:[#allocation2 + $0x48] sm:$0xff]
    %v661 = vld [vmem:[#allocation2 + $0x50] sm:$0xff]
    %v662 = vld [vmem:[#allocation2 + $0x58] sm:$0xff]
    %v663 = vld [vmem:[#allocation2 + $0x60] sm:$0xff]
    %v664 = vld [vmem:[#allocation2 + $0x68] sm:$0xff]
    %v665 = vld [vmem:[#allocation2 + $0x70] sm:$0xff]
    %v666 = vld [vmem:[#allocation2 + $0x78] sm:$0xff]
    %v667 = vld [vmem:[#allocation2 + $0x80] sm:$0xff]
    %v668 = vld [vmem:[#allocation2 + $0x88] sm:$0xff]
    %v669 = vld [vmem:[#allocation2 + $0x90] sm:$0xff]
    %v670 = vld [vmem:[#allocation2 + $0x98] sm:$0xff]
    %v671 = vld [vmem:[#allocation2 + $0xa0] sm:$0xff]
    %v672 = vld [vmem:[#allocation2 + $0xa8] sm:$0xff]
    %v673 = vld [vmem:[#allocation2 + $0xb0] sm:$0xff]
    %v674 = vld [vmem:[#allocation2 + $0xb8] sm:$0xff]
    %v675 = vld [vmem:[#allocation2 + $0xc0] sm:$0xff]
    %v676 = vld [vmem:[#allocation2 + $0xc8] sm:$0xff]
    %v677 = vld [vmem:[#allocation8] sm:$0xff]
    %v678 = vld [vmem:[#allocation8 + $0x8] sm:$0xff]
    %v679 = vld [vmem:[#allocation8 + $0x10] sm:$0xff]
    %v680 = vld [vmem:[#allocation8 + $0x18] sm:$0xff]
    %v681 = vld [vmem:[#allocation8 + $0x20] sm:$0xff]
    %v682 = vld [vmem:[#allocation8 + $0x28] sm:$0xff]
    %v683 = vld [vmem:[#allocation8 + $0x30] sm:$0xff]
    %v684 = vld [vmem:[#allocation8 + $0x38] sm:$0xff]
    %v685 = vld [vmem:[#allocation8 + $0x40] sm:$0xff]
    %v686 = vld [vmem:[#allocation8 + $0x48] sm:$0xff]
    %v687 = vld [vmem:[#allocation8 + $0x50] sm:$0xff]
    %v688 = vld [vmem:[#allocation8 + $0x58] sm:$0xff]
    %v689 = vld [vmem:[#allocation8 + $0x60] sm:$0xff]
    %v690 = vld [vmem:[#allocation8 + $0x68] sm:$0xff]
    %v691 = vld [vmem:[#allocation8 + $0x70] sm:$0xff]
    %v692 = vld [vmem:[#allocation8 + $0x78] sm:$0xff]
    %v693 = vld [vmem:[#allocation8 + $0x80] sm:$0xff]
    %v694 = vld [vmem:[#allocation8 + $0x88] sm:$0xff]
    %v695 = vld [vmem:[#allocation8 + $0x90] sm:$0xff]
    %v696 = vld [vmem:[#allocation8 + $0x98] sm:$0xff]
    %v697 = vld [vmem:[#allocation8 + $0xa0] sm:$0xff]
    %v698 = vld [vmem:[#allocation8 + $0xa8] sm:$0xff]
    %v699 = vld [vmem:[#allocation8 + $0xb0] sm:$0xff]
    %v700 = vld [vmem:[#allocation8 + $0xb8] sm:$0xff]
    %v701 = vld [vmem:[#allocation8 + $0xc0] sm:$0xff]
    %v702 = vld [vmem:[#allocation8 + $0xc8] sm:$0xff]
    %v703 = vld [vmem:[#allocation8 + $0xd0] sm:$0xff]
    %v704 = vld [vmem:[#allocation8 + $0xd8] sm:$0xff]
    %v705 = vld [vmem:[#allocation8 + $0xe0] sm:$0xff]
    %v706 = vld [vmem:[#allocation8 + $0xe8] sm:$0xff]
    %v707 = vld [vmem:[#allocation8 + $0xf0] sm:$0xff]
    %v708 = vld [vmem:[#allocation8 + $0xf8] sm:$0xff]
    %709 = vmatprep.subr.mxu0 0.0
    %710 = vmatpush1.msra.mxu0 %v692
    %711 = vmatprep.subr.mxu0 0.0
    %712 = vmatpush1.msra.mxu0 %v691
    %713 = vmatprep.subr.mxu0 0.0
    %714 = vmatpush1.msra.mxu0 %v690
    %715 = vmatprep.subr.mxu0 0.0
    %716 = vmatpush1.msra.mxu0 %v689
    %717 = vmatprep.subr.mxu0 0.0
    %718 = vmatpush1.msra.mxu0 %v688
    %719 = vmatprep.subr.mxu0 0.0
    %720 = vmatpush1.msra.mxu0 %v687
    %721 = vmatprep.subr.mxu0 0.0
    %722 = vmatpush1.msra.mxu0 %v686
    %723 = vmatprep.subr.mxu0 0.0
    %724 = vmatpush1.msra.mxu0 %v685
    %725 = vmatprep.subr.mxu0 0.0
    %726 = vmatpush1.msra.mxu0 %v684
    %727 = vmatprep.subr.mxu0 0.0
    %728 = vmatpush1.msra.mxu0 %v683
    %729 = vmatprep.subr.mxu0 0.0
    %730 = vmatpush1.msra.mxu0 %v682
    %731 = vmatprep.subr.mxu0 0.0
    %732 = vmatpush1.msra.mxu0 %v681
    %733 = vmatprep.subr.mxu0 0.0
    %734 = vmatpush1.msra.mxu0 %v680
    %735 = vmatprep.subr.mxu0 0.0
    %736 = vmatpush1.msra.mxu0 %v679
    %737 = vmatprep.subr.mxu0 0.0
    %738 = vmatpush1.msra.mxu0 %v678
    %739 = vmatprep.subr.mxu0 0.0
    %740 = vmatpush1.msra.mxu0 %v677
    %741 = vmatprep.subr.mxu0 0.0
    %742 = vmatpush2.msra.mxu0 %v708
    %743 = vmatprep.subr.mxu0 0.0
    %744 = vmatpush2.msra.mxu0 %v707
    %745 = vmatprep.subr.mxu0 0.0
    %746 = vmatpush2.msra.mxu0 %v706
    %747 = vmatprep.subr.mxu0 0.0
    %748 = vmatpush2.msra.mxu0 %v705
    %749 = vmatprep.subr.mxu0 0.0
    %750 = vmatpush2.msra.mxu0 %v704
    %751 = vmatprep.subr.mxu0 0.0
    %752 = vmatpush2.msra.mxu0 %v703
    %753 = vmatprep.subr.mxu0 0.0
    %754 = vmatpush2.msra.mxu0 %v702
    %755 = vmatprep.subr.mxu0 0.0
    %756 = vmatpush2.msra.mxu0 %v701
    %757 = vmatprep.subr.mxu0 0.0
    %758 = vmatpush2.msra.mxu0 %v700
    %759 = vmatprep.subr.mxu0 0.0
    %760 = vmatpush2.msra.mxu0 %v699
    %761 = vmatprep.subr.mxu0 0.0
    %762 = vmatpush2.msra.mxu0 %v698
    %763 = vmatprep.subr.mxu0 0.0
    %764 = vmatpush2.msra.mxu0 %v697
    %765 = vmatprep.subr.mxu0 0.0
    %766 = vmatpush2.msra.mxu0 %v696
    %767 = vmatprep.subr.mxu0 0.0
    %768 = vmatpush2.msra.mxu0 %v695
    %769 = vmatprep.subr.mxu0 0.0
    %770 = vmatpush2.msra.mxu0 %v694
    %771 = vmatprep.subr.mxu0 0.0
    %772 = vmatpush2.msra.mxu0 %v693
    %773 = vmatprep.mubr.f32.mxu0 %v600
    %774 = vmatmul.mubr.f32.gmra.mxu0 %v599
    %v775 = vpop.f32.mrf.mxu0
    %v776 = vadd.f32 0.0, %v775
    %v777 = vpop.f32.mrf.mxu0
    %778 = vmatprep.mubr.f32.mxu0 %v602
    %779 = vmatmul.mubr.f32.gmra.mxu0 %v601
    %v780 = vpop.f32.mrf.mxu0
    %v781 = vadd.f32 0.0, %v780
    %v782 = vpop.f32.mrf.mxu0
    %783 = vmatprep.mubr.f32.mxu0 %v604
    %784 = vmatmul.mubr.f32.gmra.mxu0 %v603
    %v785 = vpop.f32.mrf.mxu0
    %v786 = vadd.f32 0.0, %v785
    %v787 = vpop.f32.mrf.mxu0
    %788 = vmatprep.mubr.f32.mxu0 %v606
    %789 = vmatmul.mubr.f32.gmra.mxu0 %v605
    %v790 = vpop.f32.mrf.mxu0
    %v791 = vadd.f32 0.0, %v790
    %v792 = vpop.f32.mrf.mxu0
    %793 = vmatprep.mubr.f32.mxu0 %v608
    %794 = vmatmul.mubr.f32.gmra.mxu0 %v607
    %v795 = vpop.f32.mrf.mxu0
    %v796 = vadd.f32 0.0, %v795
    %v797 = vpop.f32.mrf.mxu0
    %798 = vmatprep.mubr.f32.mxu0 %v610
    %799 = vmatmul.mubr.f32.gmra.mxu0 %v609
    %v800 = vpop.f32.mrf.mxu0
    %v801 = vadd.f32 0.0, %v800
    %v802 = vpop.f32.mrf.mxu0
    %803 = vmatprep.mubr.f32.mxu0 %v612
    %804 = vmatmul.mubr.f32.gmra.mxu0 %v611
    %v805 = vpop.f32.mrf.mxu0
    %v806 = vadd.f32 0.0, %v805
    %v807 = vpop.f32.mrf.mxu0
    %808 = vmatprep.mubr.f32.mxu0 %v614
    %809 = vmatmul.mubr.f32.gmra.mxu0 %v613
    %v810 = vpop.f32.mrf.mxu0
    %v811 = vadd.f32 0.0, %v810
    %v812 = vpop.f32.mrf.mxu0
    %813 = vmatprep.mubr.f32.mxu0 %v616
    %814 = vmatmul.mubr.f32.gmra.mxu0 %v615
    %v815 = vpop.f32.mrf.mxu0
    %v816 = vadd.f32 0.0, %v815
    %v817 = vpop.f32.mrf.mxu0
    %818 = vmatprep.mubr.f32.mxu0 %v618
    %819 = vmatmul.mubr.f32.gmra.mxu0 %v617
    %v820 = vpop.f32.mrf.mxu0
    %v821 = vadd.f32 0.0, %v820
    %v822 = vpop.f32.mrf.mxu0
    %823 = vmatprep.mubr.f32.mxu0 %v620
    %824 = vmatmul.mubr.f32.gmra.mxu0 %v619
    %v825 = vpop.f32.mrf.mxu0
    %v826 = vadd.f32 0.0, %v825
    %v827 = vpop.f32.mrf.mxu0
    %828 = vmatprep.mubr.f32.mxu0 %v622
    %829 = vmatmul.mubr.f32.gmra.mxu0 %v621
    %v830 = vpop.f32.mrf.mxu0
    %v831 = vadd.f32 0.0, %v830
    %v832 = vpop.f32.mrf.mxu0
    %833 = vmatprep.mubr.f32.mxu0 %v624
    %834 = vmatmul.mubr.f32.gmra.mxu0 %v623
    %v835 = vpop.f32.mrf.mxu0
    %v836 = vadd.f32 0.0, %v835
    %v837 = vpop.f32.mrf.mxu0
    %838 = vmatprep.mubr.f32.mxu0 %v626
    %839 = vmatmul.mubr.f32.gmra.mxu0 %v625
    %v840 = vpop.f32.mrf.mxu0
    %v841 = vadd.f32 0.0, %v840
    %v842 = vpop.f32.mrf.mxu0
    %843 = vmatprep.mubr.f32.mxu0 %v628
    %844 = vmatmul.mubr.f32.gmra.mxu0 %v627
    %v845 = vpop.f32.mrf.mxu0
    %v846 = vadd.f32 0.0, %v845
    %v847 = vpop.f32.mrf.mxu0
    %848 = vmatprep.mubr.f32.mxu0 %v630
    %849 = vmatmul.mubr.f32.gmra.mxu0 %v629
    %v850 = vpop.f32.mrf.mxu0
    %v851 = vadd.f32 0.0, %v850
    %v852 = vpop.f32.mrf.mxu0
    %853 = vmatprep.mubr.f32.mxu0 %v632
    %854 = vmatmul.mubr.f32.gmra.mxu0 %v631
    %v855 = vpop.f32.mrf.mxu0
    %v856 = vadd.f32 0.0, %v855
    %v857 = vpop.f32.mrf.mxu0
    %858 = vmatprep.mubr.f32.mxu0 %v634
    %859 = vmatmul.mubr.f32.gmra.mxu0 %v633
    %v860 = vpop.f32.mrf.mxu0
    %v861 = vadd.f32 0.0, %v860
    %v862 = vpop.f32.mrf.mxu0
    %863 = vmatprep.mubr.f32.mxu0 %v636
    %864 = vmatmul.mubr.f32.gmra.mxu0 %v635
    %v865 = vpop.f32.mrf.mxu0
    %v866 = vadd.f32 0.0, %v865
    %v867 = vpop.f32.mrf.mxu0
    %868 = vmatprep.mubr.f32.mxu0 %v638
    %869 = vmatmul.mubr.f32.gmra.mxu0 %v637
    %v870 = vpop.f32.mrf.mxu0
    %v871 = vadd.f32 0.0, %v870
    %v872 = vpop.f32.mrf.mxu0
    %873 = vmatprep.mubr.f32.mxu0 %v640
    %874 = vmatmul.mubr.f32.gmra.mxu0 %v639
    %v875 = vpop.f32.mrf.mxu0
    %v876 = vadd.f32 0.0, %v875
    %v877 = vpop.f32.mrf.mxu0
    %878 = vmatprep.mubr.f32.mxu0 %v642
    %879 = vmatmul.mubr.f32.gmra.mxu0 %v641
    %v880 = vpop.f32.mrf.mxu0
    %v881 = vadd.f32 0.0, %v880
    %v882 = vpop.f32.mrf.mxu0
    %883 = vmatprep.mubr.f32.mxu0 %v644
    %884 = vmatmul.mubr.f32.gmra.mxu0 %v643
    %v885 = vpop.f32.mrf.mxu0
    %v886 = vadd.f32 0.0, %v885
    %v887 = vpop.f32.mrf.mxu0
    %888 = vmatprep.mubr.f32.mxu0 %v646
    %889 = vmatmul.mubr.f32.gmra.mxu0 %v645
    %v890 = vpop.f32.mrf.mxu0
    %v891 = vadd.f32 0.0, %v890
    %v892 = vpop.f32.mrf.mxu0
    %893 = vmatprep.mubr.f32.mxu0 %v648
    %894 = vmatmul.mubr.f32.gmra.mxu0 %v647
    %v895 = vpop.f32.mrf.mxu0
    %v896 = vadd.f32 0.0, %v895
    %v897 = vpop.f32.mrf.mxu0
    %898 = vmatprep.mubr.f32.mxu0 %v650
    %899 = vmatmul.mubr.f32.gmra.mxu0 %v649
    %v900 = vpop.f32.mrf.mxu0
    %v901 = vadd.f32 0.0, %v900
    %v902 = vpop.f32.mrf.mxu0
    %903 = vdwg.mxu0
    %v904 = vadd.f32 %v651, %v776
    %v905 = vadd.f32 %v652, %v781
    %v906 = vadd.f32 %v653, %v786
    %v907 = vadd.f32 %v654, %v791
    %v908 = vadd.f32 %v655, %v796
    %v909 = vadd.f32 %v656, %v801
    %v910 = vadd.f32 %v657, %v806
    %v911 = vadd.f32 %v658, %v811
    %v912 = vadd.f32 %v659, %v816
    %v913 = vadd.f32 %v660, %v821
    %v914 = vadd.f32 %v661, %v826
    %v915 = vadd.f32 %v662, %v831
    %v916 = vadd.f32 %v663, %v836
    %v917 = vadd.f32 %v664, %v841
    %v918 = vadd.f32 %v665, %v846
    %v919 = vadd.f32 %v666, %v851
    %v920 = vadd.f32 %v667, %v856
    %v921 = vadd.f32 %v668, %v861
    %v922 = vadd.f32 %v669, %v866
    %v923 = vadd.f32 %v670, %v871
    %v924 = vadd.f32 %v671, %v876
    %v925 = vadd.f32 %v672, %v881
    %v926 = vadd.f32 %v673, %v886
    %v927 = vadd.f32 %v674, %v891
    %v928 = vadd.f32 %v675, %v896
    %v929 = vadd.f32 %v676, %v901
    %930 = vst [vmem:[#allocation2] sm:$0xff] %v904
    %931 = vst [vmem:[#allocation2 + $0x8] sm:$0xff] %v905
    %932 = vst [vmem:[#allocation2 + $0x10] sm:$0xff] %v906
    %933 = vst [vmem:[#allocation2 + $0x18] sm:$0xff] %v907
    %934 = vst [vmem:[#allocation2 + $0x20] sm:$0xff] %v908
    %935 = vst [vmem:[#allocation2 + $0x28] sm:$0xff] %v909
    %936 = vst [vmem:[#allocation2 + $0x30] sm:$0xff] %v910
    %937 = vst [vmem:[#allocation2 + $0x38] sm:$0xff] %v911
    %938 = vst [vmem:[#allocation2 + $0x40] sm:$0xff] %v912
    %939 = vst [vmem:[#allocation2 + $0x48] sm:$0xff] %v913
    %940 = vst [vmem:[#allocation2 + $0x50] sm:$0xff] %v914
    %941 = vst [vmem:[#allocation2 + $0x58] sm:$0xff] %v915
    %942 = vst [vmem:[#allocation2 + $0x60] sm:$0xff] %v916
    %943 = vst [vmem:[#allocation2 + $0x68] sm:$0xff] %v917
    %944 = vst [vmem:[#allocation2 + $0x70] sm:$0xff] %v918
    %945 = vst [vmem:[#allocation2 + $0x78] sm:$0xff] %v919
    %946 = vst [vmem:[#allocation2 + $0x80] sm:$0xff] %v920
    %947 = vst [vmem:[#allocation2 + $0x88] sm:$0xff] %v921
    %948 = vst [vmem:[#allocation2 + $0x90] sm:$0xff] %v922
    %949 = vst [vmem:[#allocation2 + $0x98] sm:$0xff] %v923
    %950 = vst [vmem:[#allocation2 + $0xa0] sm:$0xff] %v924
    %951 = vst [vmem:[#allocation2 + $0xa8] sm:$0xff] %v925
    %952 = vst [vmem:[#allocation2 + $0xb0] sm:$0xff] %v926
    %953 = vst [vmem:[#allocation2 + $0xb8] sm:$0xff] %v927
    %954 = vst [vmem:[#allocation2 + $0xc0] sm:$0xff] %v928
    %955 = vst [vmem:[#allocation2 + $0xc8] sm:$0xff] %v929
    // Predicated region
    $region38: #{tpu_custom_call.1} parent=1 // pred_check
      %p956 = pneg %p62
    $region39: #{tpu_custom_call.1} parent=1 // pred_check_branch
      %958 = sbr.rel (%p956) target = $region41
    $region40: #{tpu_custom_call.1} parent=1 // pred_region
      %v959 = vld [vmem:[#allocation2] sm:$0xff]
      %v960 = vld [vmem:[#allocation2 + $0x8] sm:$0xff]
      %v961 = vld [vmem:[#allocation2 + $0x10] sm:$0xff]
      %v962 = vld [vmem:[#allocation2 + $0x18] sm:$0xff]
      %v963 = vld [vmem:[#allocation2 + $0x20] sm:$0xff]
      %v964 = vld [vmem:[#allocation2 + $0x28] sm:$0xff]
      %v965 = vld [vmem:[#allocation2 + $0x30] sm:$0xff]
      %v966 = vld [vmem:[#allocation2 + $0x38] sm:$0xff]
      %v967 = vld [vmem:[#allocation2 + $0x40] sm:$0xff]
      %v968 = vld [vmem:[#allocation2 + $0x48] sm:$0xff]
      %v969 = vld [vmem:[#allocation2 + $0x50] sm:$0xff]
      %v970 = vld [vmem:[#allocation2 + $0x58] sm:$0xff]
      %v971 = vld [vmem:[#allocation2 + $0x60] sm:$0xff]
      %v972 = vld [vmem:[#allocation2 + $0x68] sm:$0xff]
      %v973 = vld [vmem:[#allocation2 + $0x70] sm:$0xff]
      %v974 = vld [vmem:[#allocation2 + $0x78] sm:$0xff]
      %v975 = vld [vmem:[#allocation2 + $0x80] sm:$0xff]
      %v976 = vld [vmem:[#allocation2 + $0x88] sm:$0xff]
      %v977 = vld [vmem:[#allocation2 + $0x90] sm:$0xff]
      %v978 = vld [vmem:[#allocation2 + $0x98] sm:$0xff]
      %v979 = vld [vmem:[#allocation2 + $0xa0] sm:$0xff]
      %v980 = vld [vmem:[#allocation2 + $0xa8] sm:$0xff]
      %v981 = vld [vmem:[#allocation2 + $0xb0] sm:$0xff]
      %v982 = vld [vmem:[#allocation2 + $0xb8] sm:$0xff]
      %v983 = vld [vmem:[#allocation2 + $0xc0] sm:$0xff]
      %v984 = vld [vmem:[#allocation2 + $0xc8] sm:$0xff]
      %985 = vst [vmem:[#allocation9] sm:$0xff] %v959
      %986 = vst [vmem:[#allocation9 + $0x8] sm:$0xff] %v960
      %987 = vst [vmem:[#allocation9 + $0x10] sm:$0xff] %v961
      %988 = vst [vmem:[#allocation9 + $0x18] sm:$0xff] %v962
      %989 = vst [vmem:[#allocation9 + $0x20] sm:$0xff] %v963
      %990 = vst [vmem:[#allocation9 + $0x28] sm:$0xff] %v964
      %991 = vst [vmem:[#allocation9 + $0x30] sm:$0xff] %v965
      %992 = vst [vmem:[#allocation9 + $0x38] sm:$0xff] %v966
      %993 = vst [vmem:[#allocation9 + $0x40] sm:$0xff] %v967
      %994 = vst [vmem:[#allocation9 + $0x48] sm:$0xff] %v968
      %995 = vst [vmem:[#allocation9 + $0x50] sm:$0xff] %v969
      %996 = vst [vmem:[#allocation9 + $0x58] sm:$0xff] %v970
      %997 = vst [vmem:[#allocation9 + $0x60] sm:$0xff] %v971
      %998 = vst [vmem:[#allocation9 + $0x68] sm:$0xff] %v972
      %999 = vst [vmem:[#allocation9 + $0x70] sm:$0xff] %v973
      %1000 = vst [vmem:[#allocation9 + $0x78] sm:$0xff] %v974
      %1001 = vst [vmem:[#allocation9 + $0x80] sm:$0xff] %v975
      %1002 = vst [vmem:[#allocation9 + $0x88] sm:$0xff] %v976
      %1003 = vst [vmem:[#allocation9 + $0x90] sm:$0xff] %v977
      %1004 = vst [vmem:[#allocation9 + $0x98] sm:$0xff] %v978
      %1005 = vst [vmem:[#allocation9 + $0xa0] sm:$0xff] %v979
      %1006 = vst [vmem:[#allocation9 + $0xa8] sm:$0xff] %v980
      %1007 = vst [vmem:[#allocation9 + $0xb0] sm:$0xff] %v981
      %1008 = vst [vmem:[#allocation9 + $0xb8] sm:$0xff] %v982
      %1009 = vst [vmem:[#allocation9 + $0xc0] sm:$0xff] %v983
      %1010 = vst [vmem:[#allocation9 + $0xc8] sm:$0xff] %v984
    $region41: #{tpu_custom_call.1} parent=1 // pred_fallthru
      _
    // Predicated region
    $region42: #{tpu_custom_call.1} parent=1 // pred_check
      _
    $region43: #{tpu_custom_call.1} parent=1 // pred_check_branch
      %1012 = sbr.rel (0) target = $region45
    $region44: #{tpu_custom_call.1} parent=1 // pred_region
      %s1014 = ssub.s32 3328, 3328
      %1015 = vsyncadd [#allocation5], %s1014
      %s1016 = sshll.u32 [#allocation9], 4
      %s1017 = int_to_ptr.vmem [resolvable:$true] %s1016
      %1022 = dma.vmem_to_hbm [thread:$0]  %s1017, 3328, %s5, [#allocation5], 128, 128, 8
    $region45: #{tpu_custom_call.1} parent=1 // pred_fallthru
      _
    // Predicated region
    $region46: #{tpu_custom_call.1} parent=1 // pred_check
      _
    $region47: #{tpu_custom_call.1} parent=1 // pred_check_branch
      %1024 = sbr.rel (0) target = $region49
    $region48: #{tpu_custom_call.1} parent=1 // pred_region
      %1025 = dma.done [#allocation5], 3328
    $region49: #{tpu_custom_call.1} parent=1 // pred_fallthru
      _
    %1026 = vsyncpa [#allocation4], 1
    %1027 = vsyncpa [#allocation7], 1
    %1028 = vsyncpa [#allocation5], 1

// kernel: tpu_custom_call.1
$region0: #{tpu_custom_call.1}
  #allocation0 [shape = 'u32[]', space=smem, size = 0x4, offset = 0x4, fixed_abs, tag = 'smem constant byte address 0x4 - core index']
  #allocation1 [shape = 'u32[144,128]{1,0:T(1,128)}', space=vmem, size = 0x12000, scoped, tag = 'internal scratch']
  #allocation2 [shape = 'f32[208,128]{1,0:T(8,128)}', space=vmem, size = 0x1a000, scoped, tag = 'scratch operand']
  %s0 = inlined_call_operand.hbm [shape: f32[208,128], index: 0, kind: input, shape index: {}]
  %s1 = inlined_call_operand.hbm [shape: f32[128,256], index: 1, kind: input, shape index: {}]
  %s2 = inlined_call_operand.vmem [shape: f32[1,256], index: 2, kind: input, shape index: {}]
  %s3 = inlined_call_operand.hbm [shape: f32[256,128], index: 3, kind: input, shape index: {}]
  %s4 = inlined_call_operand.vmem [shape: f32[1,128], index: 4, kind: input, shape index: {}]
  %s5 = inlined_call_operand.hbm [shape: f32[208,128], index: 5, kind: output, shape index: {}]
  %s6 = sld [smem:[#allocation0]]
  $region50: #{tpu_custom_call.1} parent=0
    _
  %s8 = ssub.s32 1, %s6
  %s9 = scalar_select 0, %s8, %s6
  $region1: #{tpu_custom_call.1} parent=0
    #allocation3 [shape = 'u8[106496]{0}', space=vmem, size = 0x1a000, scoped, tag = 'input window, operand 0, single buffered']
    #allocation4 [shape = 's32[1]{0}', space=sflag, size = 0x4, scoped, tag = 'scoped memory for tpu_custom_call.1']
    #allocation5 [shape = 's32[1]{0}', space=sflag, size = 0x4, scoped, tag = 'scoped memory for tpu_custom_call.1']
    #allocation6 [shape = 'u8[131072]{0}', space=vmem, size = 0x20000, scoped, tag = 'input window, operand 1, single buffered']
    #allocation7 [shape = 's32[1]{0}', space=sflag, size = 0x4, scoped, tag = 'scoped memory for tpu_custom_call.1']
    #allocation8 [shape = 'u8[131072]{0}', space=vmem, size = 0x20000, scoped, tag = 'input window, operand 3, single buffered']
    #allocation9 [shape = 'u8[106496]{0}', space=vmem, size = 0x1a000, scoped, tag = 'output window, operand 0, single buffered']
    %10 = vsyncpa [#allocation4], 0
    %11 = vsyncpa [#allocation7], 0
    %12 = vsyncpa [#allocation5], 0
    // Predicated region
    $region2: #{tpu_custom_call.1} parent=1 // pred_check
      _
    $region3: #{tpu_custom_call.1} parent=1 // pred_check_branch
      %14 = sbr.rel (0) target = $region5
    $region4: #{tpu_custom_call.1} parent=1 // pred_region
      %s16 = ssub.s32 3328, 3328
      %17 = vsyncadd [#allocation4], %s16
      %s18 = sshll.u32 [#allocation3], 4
      %s19 = int_to_ptr.vmem [resolvable:$true] %s18
      %24 = dma.hbm_to_vmem [thread:$0]  %s0, 3328, %s19, [#allocation4], 128, 128, 8
    $region5: #{tpu_custom_call.1} parent=1 // pred_fallthru
      _
    // Predicated region
    $region6: #{tpu_custom_call.1} parent=1 // pred_check
      _
    $region7: #{tpu_custom_call.1} parent=1 // pred_check_branch
      %26 = sbr.rel (0) target = $region9
    $region8: #{tpu_custom_call.1} parent=1 // pred_region
      %s28 = ssub.s32 4096, 4096
      %29 = vsyncadd [#allocation7], %s28
      %s30 = sshll.u32 [#allocation6], 4
      %s31 = int_to_ptr.vmem [resolvable:$true] %s30
      %36 = dma.hbm_to_vmem [thread:$0]  %s1, 4096, %s31, [#allocation7], 256, 256, 16
    $region9: #{tpu_custom_call.1} parent=1 // pred_fallthru
      _
    // Predicated region
    $region10: #{tpu_custom_call.1} parent=1 // pred_check
      _
    $region11: #{tpu_custom_call.1} parent=1 // pred_check_branch
      %38 = sbr.rel (0) target = $region13
    $region12: #{tpu_custom_call.1} parent=1 // pred_region
      _
    $region13: #{tpu_custom_call.1} parent=1 // pred_fallthru
      _
    // Predicated region
    $region14: #{tpu_custom_call.1} parent=1 // pred_check
      _
    $region15: #{tpu_custom_call.1} parent=1 // pred_check_branch
      %40 = sbr.rel (0) target = $region17
    $region16: #{tpu_custom_call.1} parent=1 // pred_region
      %s42 = ssub.s32 4096, 4096
      %43 = vsyncadd [#allocation7], %s42
      %s44 = sshll.u32 [#allocation8], 4
      %s45 = int_to_ptr.vmem [resolvable:$true] %s44
      %50 = dma.hbm_to_vmem [thread:$0]  %s3, 4096, %s45, [#allocation7], 128, 128, 8
    $region17: #{tpu_custom_call.1} parent=1 // pred_fallthru
      _
    // Predicated region
    $region18: #{tpu_custom_call.1} parent=1 // pred_check
      _
    $region19: #{tpu_custom_call.1} parent=1 // pred_check_branch
      %52 = sbr.rel (0) target = $region21
    $region20: #{tpu_custom_call.1} parent=1 // pred_region
      _
    $region21: #{tpu_custom_call.1} parent=1 // pred_fallthru
      _
    // Predicated region
    $region22: #{tpu_custom_call.1} parent=1 // pred_check
      _
    $region23: #{tpu_custom_call.1} parent=1 // pred_check_branch
      %54 = sbr.rel (0) target = $region25
    $region24: #{tpu_custom_call.1} parent=1 // pred_region
      %55 = dma.done [#allocation4], 3328
    $region25: #{tpu_custom_call.1} parent=1 // pred_fallthru
      _
    // Predicated region
    $region26: #{tpu_custom_call.1} parent=1 // pred_check
      _
    $region27: #{tpu_custom_call.1} parent=1 // pred_check_branch
      %57 = sbr.rel (0) target = $region29
    $region28: #{tpu_custom_call.1} parent=1 // pred_region
      %58 = dma.done [#allocation7], 4096
    $region29: #{tpu_custom_call.1} parent=1 // pred_fallthru
      _
    // Predicated region
    $region30: #{tpu_custom_call.1} parent=1 // pred_check
      _
    $region31: #{tpu_custom_call.1} parent=1 // pred_check_branch
      %60 = sbr.rel (0) target = $region33
    $region32: #{tpu_custom_call.1} parent=1 // pred_region
      %61 = dma.done [#allocation7], 4096
    $region33: #{tpu_custom_call.1} parent=1 // pred_fallthru
      _
    %p62 = scmp.eq.s32.totalorder 0, 0
    // Predicated region
    $region34: #{tpu_custom_call.1} parent=1 // pred_check
      %p63 = pneg %p62
    $region35: #{tpu_custom_call.1} parent=1 // pred_check_branch
      %65 = sbr.rel (%p63) target = $region37
    $region36: #{tpu_custom_call.1} parent=1 // pred_region
      %v66 = vld [vmem:[%s4] sm:$0x1]
      %v68 = vlaneseq
      %v69 = vshrl.u32 %v68, 7
      %v70 = vsub.s32 0, %v69
      %v71 = vrot.slane %v66, %v70
      %v73 = vadd.f32 %v71, 0.0
      %74 = vst [vmem:[#allocation2] sm:$0xff] %v73
      %75 = vst [vmem:[#allocation2 + $0x8] sm:$0xff] %v73
      %76 = vst [vmem:[#allocation2 + $0x10] sm:$0xff] %v73
      %77 = vst [vmem:[#allocation2 + $0x18] sm:$0xff] %v73
      %78 = vst [vmem:[#allocation2 + $0x20] sm:$0xff] %v73
      %79 = vst [vmem:[#allocation2 + $0x28] sm:$0xff] %v73
      %80 = vst [vmem:[#allocation2 + $0x30] sm:$0xff] %v73
      %81 = vst [vmem:[#allocation2 + $0x38] sm:$0xff] %v73
      %82 = vst [vmem:[#allocation2 + $0x40] sm:$0xff] %v73
      %83 = vst [vmem:[#allocation2 + $0x48] sm:$0xff] %v73
      %84 = vst [vmem:[#allocation2 + $0x50] sm:$0xff] %v73
      %85 = vst [vmem:[#allocation2 + $0x58] sm:$0xff] %v73
      %86 = vst [vmem:[#allocation2 + $0x60] sm:$0xff] %v73
      %87 = vst [vmem:[#allocation2 + $0x68] sm:$0xff] %v73
      %88 = vst [vmem:[#allocation2 + $0x70] sm:$0xff] %v73
      %89 = vst [vmem:[#allocation2 + $0x78] sm:$0xff] %v73
      %90 = vst [vmem:[#allocation2 + $0x80] sm:$0xff] %v73
      %91 = vst [vmem:[#allocation2 + $0x88] sm:$0xff] %v73
      %92 = vst [vmem:[#allocation2 + $0x90] sm:$0xff] %v73
      %93 = vst [vmem:[#allocation2 + $0x98] sm:$0xff] %v73
      %94 = vst [vmem:[#allocation2 + $0xa0] sm:$0xff] %v73
      %95 = vst [vmem:[#allocation2 + $0xa8] sm:$0xff] %v73
      %96 = vst [vmem:[#allocation2 + $0xb0] sm:$0xff] %v73
      %97 = vst [vmem:[#allocation2 + $0xb8] sm:$0xff] %v73
      %98 = vst [vmem:[#allocation2 + $0xc0] sm:$0xff] %v73
      %99 = vst [vmem:[#allocation2 + $0xc8] sm:$0xff] %v73
    $region37: #{tpu_custom_call.1} parent=1 // pred_fallthru
      _
    %v100 = vld [vmem:[#allocation3] sm:$0xff]
    %v101 = vld [vmem:[#allocation3 + $0x8] sm:$0xff]
    %v102 = vld [vmem:[#allocation3 + $0x10] sm:$0xff]
    %v103 = vld [vmem:[#allocation3 + $0x18] sm:$0xff]
    %v104 = vld [vmem:[#allocation3 + $0x20] sm:$0xff]
    %v105 = vld [vmem:[#allocation3 + $0x28] sm:$0xff]
    %v106 = vld [vmem:[#allocation3 + $0x30] sm:$0xff]
    %v107 = vld [vmem:[#allocation3 + $0x38] sm:$0xff]
    %v108 = vld [vmem:[#allocation3 + $0x40] sm:$0xff]
    %v109 = vld [vmem:[#allocation3 + $0x48] sm:$0xff]
    %v110 = vld [vmem:[#allocation3 + $0x50] sm:$0xff]
    %v111 = vld [vmem:[#allocation3 + $0x58] sm:$0xff]
    %v112 = vld [vmem:[#allocation3 + $0x60] sm:$0xff]
    %v113 = vld [vmem:[#allocation3 + $0x68] sm:$0xff]
    %v114 = vld [vmem:[#allocation3 + $0x70] sm:$0xff]
    %v115 = vld [vmem:[#allocation3 + $0x78] sm:$0xff]
    %v116 = vld [vmem:[#allocation3 + $0x80] sm:$0xff]
    %v117 = vld [vmem:[#allocation3 + $0x88] sm:$0xff]
    %v118 = vld [vmem:[#allocation3 + $0x90] sm:$0xff]
    %v119 = vld [vmem:[#allocation3 + $0x98] sm:$0xff]
    %v120 = vld [vmem:[#allocation3 + $0xa0] sm:$0xff]
    %v121 = vld [vmem:[#allocation3 + $0xa8] sm:$0xff]
    %v122 = vld [vmem:[#allocation3 + $0xb0] sm:$0xff]
    %v123 = vld [vmem:[#allocation3 + $0xb8] sm:$0xff]
    %v124 = vld [vmem:[#allocation3 + $0xc0] sm:$0xff]
    %v125 = vld [vmem:[#allocation3 + $0xc8] sm:$0xff]
    %v126 = vld [vmem:[#allocation6] sm:$0xff]
    %v127 = vld [vmem:[#allocation6 + $0x8] sm:$0xff]
    %v128 = vld [vmem:[#allocation6 + $0x10] sm:$0xff]
    %v129 = vld [vmem:[#allocation6 + $0x18] sm:$0xff]
    %v130 = vld [vmem:[#allocation6 + $0x20] sm:$0xff]
    %v131 = vld [vmem:[#allocation6 + $0x28] sm:$0xff]
    %v132 = vld [vmem:[#allocation6 + $0x30] sm:$0xff]
    %v133 = vld [vmem:[#allocation6 + $0x38] sm:$0xff]
    %v134 = vld [vmem:[#allocation6 + $0x40] sm:$0xff]
    %v135 = vld [vmem:[#allocation6 + $0x48] sm:$0xff]
    %v136 = vld [vmem:[#allocation6 + $0x50] sm:$0xff]
    %v137 = vld [vmem:[#allocation6 + $0x58] sm:$0xff]
    %v138 = vld [vmem:[#allocation6 + $0x60] sm:$0xff]
    %v139 = vld [vmem:[#allocation6 + $0x68] sm:$0xff]
    %v140 = vld [vmem:[#allocation6 + $0x70] sm:$0xff]
    %v141 = vld [vmem:[#allocation6 + $0x78] sm:$0xff]
    %v142 = vld [vmem:[#allocation6 + $0x80] sm:$0xff]
    %v143 = vld [vmem:[#allocation6 + $0x88] sm:$0xff]
    %v144 = vld [vmem:[#allocation6 + $0x90] sm:$0xff]
    %v145 = vld [vmem:[#allocation6 + $0x98] sm:$0xff]
    %v146 = vld [vmem:[#allocation6 + $0xa0] sm:$0xff]
    %v147 = vld [vmem:[#allocation6 + $0xa8] sm:$0xff]
    %v148 = vld [vmem:[#allocation6 + $0xb0] sm:$0xff]
    %v149 = vld [vmem:[#allocation6 + $0xb8] sm:$0xff]
    %v150 = vld [vmem:[#allocation6 + $0xc0] sm:$0xff]
    %v151 = vld [vmem:[#allocation6 + $0xc8] sm:$0xff]
    %v152 = vld [vmem:[#allocation6 + $0xd0] sm:$0xff]
    %v153 = vld [vmem:[#allocation6 + $0xd8] sm:$0xff]
    %v154 = vld [vmem:[#allocation6 + $0xe0] sm:$0xff]
    %v155 = vld [vmem:[#allocation6 + $0xe8] sm:$0xff]
    %v156 = vld [vmem:[#allocation6 + $0xf0] sm:$0xff]
    %v157 = vld [vmem:[#allocation6 + $0xf8] sm:$0xff]
    %v158 = vld [vmem:[%s2] sm:$0x3]
    %v160 = vlaneseq
    %v161 = vshrl.u32 %v160, 7
    %v162 = vsub.s32 0, %v161
    %v163 = vrot.slane %v158, %v162
    %v164 = vlaneseq
    %v165 = vshrl.u32 %v164, 7
    %v166 = vsub.s32 1, %v165
    %v167 = vrot.slane %v158, %v166
    %170 = vmatprep.subr.mxu0 %v157
    %171 = vmatpush1.msra.mxu0 %v156
    %172 = vmatprep.subr.mxu0 %v155
    %173 = vmatpush1.msra.mxu0 %v154
    %174 = vmatprep.subr.mxu0 %v153
    %175 = vmatpush1.msra.mxu0 %v152
    %176 = vmatprep.subr.mxu0 %v151
    %177 = vmatpush1.msra.mxu0 %v150
    %178 = vmatprep.subr.mxu0 %v149
    %179 = vmatpush1.msra.mxu0 %v148
    %180 = vmatprep.subr.mxu0 %v147
    %181 = vmatpush1.msra.mxu0 %v146
    %182 = vmatprep.subr.mxu0 %v145
    %183 = vmatpush1.msra.mxu0 %v144
    %184 = vmatprep.subr.mxu0 %v143
    %185 = vmatpush1.msra.mxu0 %v142
    %186 = vmatprep.subr.mxu0 %v141
    %187 = vmatpush1.msra.mxu0 %v140
    %188 = vmatprep.subr.mxu0 %v139
    %189 = vmatpush1.msra.mxu0 %v138
    %190 = vmatprep.subr.mxu0 %v137
    %191 = vmatpush1.msra.mxu0 %v136
    %192 = vmatprep.subr.mxu0 %v135
    %193 = vmatpush1.msra.mxu0 %v134
    %194 = vmatprep.subr.mxu0 %v133
    %195 = vmatpush1.msra.mxu0 %v132
    %196 = vmatprep.subr.mxu0 %v131
    %197 = vmatpush1.msra.mxu0 %v130
    %198 = vmatprep.subr.mxu0 %v129
    %199 = vmatpush1.msra.mxu0 %v128
    %200 = vmatprep.subr.mxu0 %v127
    %201 = vmatpush1.msra.mxu0 %v126
    %202 = vmatprep.subr.mxu0 0.0
    %203 = vmatpush2.msra.mxu0 0.0
    %204 = vmatprep.subr.mxu0 0.0
    %205 = vmatpush2.msra.mxu0 0.0
    %206 = vmatprep.subr.mxu0 0.0
    %207 = vmatpush2.msra.mxu0 0.0
    %208 = vmatprep.subr.mxu0 0.0
    %209 = vmatpush2.msra.mxu0 0.0
    %210 = vmatprep.subr.mxu0 0.0
    %211 = vmatpush2.msra.mxu0 0.0
    %212 = vmatprep.subr.mxu0 0.0
    %213 = vmatpush2.msra.mxu0 0.0
    %214 = vmatprep.subr.mxu0 0.0
    %215 = vmatpush2.msra.mxu0 0.0
    %216 = vmatprep.subr.mxu0 0.0
    %217 = vmatpush2.msra.mxu0 0.0
    %218 = vmatprep.subr.mxu0 0.0
    %219 = vmatpush2.msra.mxu0 0.0
    %220 = vmatprep.subr.mxu0 0.0
    %221 = vmatpush2.msra.mxu0 0.0
    %222 = vmatprep.subr.mxu0 0.0
    %223 = vmatpush2.msra.mxu0 0.0
    %224 = vmatprep.subr.mxu0 0.0
    %225 = vmatpush2.msra.mxu0 0.0
    %226 = vmatprep.subr.mxu0 0.0
    %227 = vmatpush2.msra.mxu0 0.0
    %228 = vmatprep.subr.mxu0 0.0
    %229 = vmatpush2.msra.mxu0 0.0
    %230 = vmatprep.subr.mxu0 0.0
    %231 = vmatpush2.msra.mxu0 0.0
    %232 = vmatprep.subr.mxu0 0.0
    %233 = vmatpush2.msra.mxu0 0.0
    %234 = vmatprep.mubr.f32.mxu0 0.0
    %235 = vmatmul.mubr.f32.gmra.mxu0 %v100
    %v236 = vpop.f32.mrf.mxu0
    %v237 = vadd.f32 %v163, %v236
    %v238 = vpop.f32.mrf.mxu0
    %v239 = vadd.f32 %v167, %v238
    %240 = vmatprep.mubr.f32.mxu0 0.0
    %241 = vmatmul.mubr.f32.gmra.mxu0 %v101
    %v242 = vpop.f32.mrf.mxu0
    %v243 = vadd.f32 %v163, %v242
    %v244 = vpop.f32.mrf.mxu0
    %v245 = vadd.f32 %v167, %v244
    %246 = vmatprep.mubr.f32.mxu0 0.0
    %247 = vmatmul.mubr.f32.gmra.mxu0 %v102
    %v248 = vpop.f32.mrf.mxu0
    %v249 = vadd.f32 %v163, %v248
    %v250 = vpop.f32.mrf.mxu0
    %v251 = vadd.f32 %v167, %v250
    %252 = vmatprep.mubr.f32.mxu0 0.0
    %253 = vmatmul.mubr.f32.gmra.mxu0 %v103
    %v254 = vpop.f32.mrf.mxu0
    %v255 = vadd.f32 %v163, %v254
    %v256 = vpop.f32.mrf.mxu0
    %v257 = vadd.f32 %v167, %v256
    %258 = vmatprep.mubr.f32.mxu0 0.0
    %259 = vmatmul.mubr.f32.gmra.mxu0 %v104
    %v260 = vpop.f32.mrf.mxu0
    %v261 = vadd.f32 %v163, %v260
    %v262 = vpop.f32.mrf.mxu0
    %v263 = vadd.f32 %v167, %v262
    %264 = vmatprep.mubr.f32.mxu0 0.0
    %265 = vmatmul.mubr.f32.gmra.mxu0 %v105
    %v266 = vpop.f32.mrf.mxu0
    %v267 = vadd.f32 %v163, %v266
    %v268 = vpop.f32.mrf.mxu0
    %v269 = vadd.f32 %v167, %v268
    %270 = vmatprep.mubr.f32.mxu0 0.0
    %271 = vmatmul.mubr.f32.gmra.mxu0 %v106
    %v272 = vpop.f32.mrf.mxu0
    %v273 = vadd.f32 %v163, %v272
    %v274 = vpop.f32.mrf.mxu0
    %v275 = vadd.f32 %v167, %v274
    %276 = vmatprep.mubr.f32.mxu0 0.0
    %277 = vmatmul.mubr.f32.gmra.mxu0 %v107
    %v278 = vpop.f32.mrf.mxu0
    %v279 = vadd.f32 %v163, %v278
    %v280 = vpop.f32.mrf.mxu0
    %v281 = vadd.f32 %v167, %v280
    %282 = vmatprep.mubr.f32.mxu0 0.0
    %283 = vmatmul.mubr.f32.gmra.mxu0 %v108
    %v284 = vpop.f32.mrf.mxu0
    %v285 = vadd.f32 %v163, %v284
    %v286 = vpop.f32.mrf.mxu0
    %v287 = vadd.f32 %v167, %v286
    %288 = vmatprep.mubr.f32.mxu0 0.0
    %289 = vmatmul.mubr.f32.gmra.mxu0 %v109
    %v290 = vpop.f32.mrf.mxu0
    %v291 = vadd.f32 %v163, %v290
    %v292 = vpop.f32.mrf.mxu0
    %v293 = vadd.f32 %v167, %v292
    %294 = vmatprep.mubr.f32.mxu0 0.0
    %295 = vmatmul.mubr.f32.gmra.mxu0 %v110
    %v296 = vpop.f32.mrf.mxu0
    %v297 = vadd.f32 %v163, %v296
    %v298 = vpop.f32.mrf.mxu0
    %v299 = vadd.f32 %v167, %v298
    %300 = vmatprep.mubr.f32.mxu0 0.0
    %301 = vmatmul.mubr.f32.gmra.mxu0 %v111
    %v302 = vpop.f32.mrf.mxu0
    %v303 = vadd.f32 %v163, %v302
    %v304 = vpop.f32.mrf.mxu0
    %v305 = vadd.f32 %v167, %v304
    %306 = vmatprep.mubr.f32.mxu0 0.0
    %307 = vmatmul.mubr.f32.gmra.mxu0 %v112
    %v308 = vpop.f32.mrf.mxu0
    %v309 = vadd.f32 %v163, %v308
    %v310 = vpop.f32.mrf.mxu0
    %v311 = vadd.f32 %v167, %v310
    %312 = vmatprep.mubr.f32.mxu0 0.0
    %313 = vmatmul.mubr.f32.gmra.mxu0 %v113
    %v314 = vpop.f32.mrf.mxu0
    %v315 = vadd.f32 %v163, %v314
    %v316 = vpop.f32.mrf.mxu0
    %v317 = vadd.f32 %v167, %v316
    %318 = vmatprep.mubr.f32.mxu0 0.0
    %319 = vmatmul.mubr.f32.gmra.mxu0 %v114
    %v320 = vpop.f32.mrf.mxu0
    %v321 = vadd.f32 %v163, %v320
    %v322 = vpop.f32.mrf.mxu0
    %v323 = vadd.f32 %v167, %v322
    %324 = vmatprep.mubr.f32.mxu0 0.0
    %325 = vmatmul.mubr.f32.gmra.mxu0 %v115
    %v326 = vpop.f32.mrf.mxu0
    %v327 = vadd.f32 %v163, %v326
    %v328 = vpop.f32.mrf.mxu0
    %v329 = vadd.f32 %v167, %v328
    %330 = vmatprep.mubr.f32.mxu0 0.0
    %331 = vmatmul.mubr.f32.gmra.mxu0 %v116
    %v332 = vpop.f32.mrf.mxu0
    %v333 = vadd.f32 %v163, %v332
    %v334 = vpop.f32.mrf.mxu0
    %v335 = vadd.f32 %v167, %v334
    %336 = vmatprep.mubr.f32.mxu0 0.0
    %337 = vmatmul.mubr.f32.gmra.mxu0 %v117
    %v338 = vpop.f32.mrf.mxu0
    %v339 = vadd.f32 %v163, %v338
    %v340 = vpop.f32.mrf.mxu0
    %v341 = vadd.f32 %v167, %v340
    %342 = vmatprep.mubr.f32.mxu0 0.0
    %343 = vmatmul.mubr.f32.gmra.mxu0 %v118
    %v344 = vpop.f32.mrf.mxu0
    %v345 = vadd.f32 %v163, %v344
    %v346 = vpop.f32.mrf.mxu0
    %v347 = vadd.f32 %v167, %v346
    %348 = vmatprep.mubr.f32.mxu0 0.0
    %349 = vmatmul.mubr.f32.gmra.mxu0 %v119
    %v350 = vpop.f32.mrf.mxu0
    %v351 = vadd.f32 %v163, %v350
    %v352 = vpop.f32.mrf.mxu0
    %v353 = vadd.f32 %v167, %v352
    %354 = vmatprep.mubr.f32.mxu0 0.0
    %355 = vmatmul.mubr.f32.gmra.mxu0 %v120
    %v356 = vpop.f32.mrf.mxu0
    %v357 = vadd.f32 %v163, %v356
    %v358 = vpop.f32.mrf.mxu0
    %v359 = vadd.f32 %v167, %v358
    %360 = vmatprep.mubr.f32.mxu0 0.0
    %361 = vmatmul.mubr.f32.gmra.mxu0 %v121
    %v362 = vpop.f32.mrf.mxu0
    %v363 = vadd.f32 %v163, %v362
    %v364 = vpop.f32.mrf.mxu0
    %v365 = vadd.f32 %v167, %v364
    %366 = vmatprep.mubr.f32.mxu0 0.0
    %367 = vmatmul.mubr.f32.gmra.mxu0 %v122
    %v368 = vpop.f32.mrf.mxu0
    %v369 = vadd.f32 %v163, %v368
    %v370 = vpop.f32.mrf.mxu0
    %v371 = vadd.f32 %v167, %v370
    %372 = vmatprep.mubr.f32.mxu0 0.0
    %373 = vmatmul.mubr.f32.gmra.mxu0 %v123
    %v374 = vpop.f32.mrf.mxu0
    %v375 = vadd.f32 %v163, %v374
    %v376 = vpop.f32.mrf.mxu0
    %v377 = vadd.f32 %v167, %v376
    %378 = vmatprep.mubr.f32.mxu0 0.0
    %379 = vmatmul.mubr.f32.gmra.mxu0 %v124
    %v380 = vpop.f32.mrf.mxu0
    %v381 = vadd.f32 %v163, %v380
    %v382 = vpop.f32.mrf.mxu0
    %v383 = vadd.f32 %v167, %v382
    %384 = vmatprep.mubr.f32.mxu0 0.0
    %385 = vmatmul.mubr.f32.gmra.mxu0 %v125
    %v386 = vpop.f32.mrf.mxu0
    %v387 = vadd.f32 %v163, %v386
    %v388 = vpop.f32.mrf.mxu0
    %v389 = vadd.f32 %v167, %v388
    %390 = vdwg.mxu0
    %v391 = vmul.f32 %v237, 0.5
    %v392 = vmul.f32 %v239, 0.5
    %v393 = vmul.f32 %v243, 0.5
    %v394 = vmul.f32 %v245, 0.5
    %v395 = vmul.f32 %v249, 0.5
    %v396 = vmul.f32 %v251, 0.5
    %v397 = vmul.f32 %v255, 0.5
    %v398 = vmul.f32 %v257, 0.5
    %v399 = vmul.f32 %v261, 0.5
    %v400 = vmul.f32 %v263, 0.5
    %v401 = vmul.f32 %v267, 0.5
    %v402 = vmul.f32 %v269, 0.5
    %v403 = vmul.f32 %v273, 0.5
    %v404 = vmul.f32 %v275, 0.5
    %v405 = vmul.f32 %v279, 0.5
    %v406 = vmul.f32 %v281, 0.5
    %v407 = vmul.f32 %v285, 0.5
    %v408 = vmul.f32 %v287, 0.5
    %v409 = vmul.f32 %v291, 0.5
    %v410 = vmul.f32 %v293, 0.5
    %v411 = vmul.f32 %v297, 0.5
    %v412 = vmul.f32 %v299, 0.5
    %v413 = vmul.f32 %v303, 0.5
    %v414 = vmul.f32 %v305, 0.5
    %v415 = vmul.f32 %v309, 0.5
    %v416 = vmul.f32 %v311, 0.5
    %v417 = vmul.f32 %v315, 0.5
    %v418 = vmul.f32 %v317, 0.5
    %v419 = vmul.f32 %v321, 0.5
    %v420 = vmul.f32 %v323, 0.5
    %v421 = vmul.f32 %v327, 0.5
    %v422 = vmul.f32 %v329, 0.5
    %v423 = vmul.f32 %v333, 0.5
    %v424 = vmul.f32 %v335, 0.5
    %v425 = vmul.f32 %v339, 0.5
    %v426 = vmul.f32 %v341, 0.5
    %v427 = vmul.f32 %v345, 0.5
    %v428 = vmul.f32 %v347, 0.5
    %v429 = vmul.f32 %v351, 0.5
    %v430 = vmul.f32 %v353, 0.5
    %v431 = vmul.f32 %v357, 0.5
    %v432 = vmul.f32 %v359, 0.5
    %v433 = vmul.f32 %v363, 0.5
    %v434 = vmul.f32 %v365, 0.5
    %v435 = vmul.f32 %v369, 0.5
    %v436 = vmul.f32 %v371, 0.5
    %v437 = vmul.f32 %v375, 0.5
    %v438 = vmul.f32 %v377, 0.5
    %v439 = vmul.f32 %v381, 0.5
    %v440 = vmul.f32 %v383, 0.5
    %v441 = vmul.f32 %v387, 0.5
    %v442 = vmul.f32 %v389, 0.5
    %v443 = vmul.f32 %v237, 0.70710677
    %v444 = vmul.f32 %v239, 0.70710677
    %v445 = vmul.f32 %v243, 0.70710677
    %v446 = vmul.f32 %v245, 0.70710677
    %v447 = vmul.f32 %v249, 0.70710677
    %v448 = vmul.f32 %v251, 0.70710677
    %v449 = vmul.f32 %v255, 0.70710677
    %v450 = vmul.f32 %v257, 0.70710677
    %v451 = vmul.f32 %v261, 0.70710677
    %v452 = vmul.f32 %v263, 0.70710677
    %v453 = vmul.f32 %v267, 0.70710677
    %v454 = vmul.f32 %v269, 0.70710677
    %v455 = vmul.f32 %v273, 0.70710677
    %v456 = vmul.f32 %v275, 0.70710677
    %v457 = vmul.f32 %v279, 0.70710677
    %v458 = vmul.f32 %v281, 0.70710677
    %v459 = vmul.f32 %v285, 0.70710677
    %v460 = vmul.f32 %v287, 0.70710677
    %v461 = vmul.f32 %v291, 0.70710677
    %v462 = vmul.f32 %v293, 0.70710677
    %v463 = vmul.f32 %v297, 0.70710677
    %v464 = vmul.f32 %v299, 0.70710677
    %v465 = vmul.f32 %v303, 0.70710677
    %v466 = vmul.f32 %v305, 0.70710677
    %v467 = vmul.f32 %v309, 0.70710677
    %v468 = vmul.f32 %v311, 0.70710677
    %v469 = vmul.f32 %v315, 0.70710677
    %v470 = vmul.f32 %v317, 0.70710677
    %v471 = vmul.f32 %v321, 0.70710677
    %v472 = vmul.f32 %v323, 0.70710677
    %v473 = vmul.f32 %v327, 0.70710677
    %v474 = vmul.f32 %v329, 0.70710677
    %v475 = vmul.f32 %v333, 0.70710677
    %v476 = vmul.f32 %v335, 0.70710677
    %v477 = vmul.f32 %v339, 0.70710677
    %v478 = vmul.f32 %v341, 0.70710677
    %v479 = vmul.f32 %v345, 0.70710677
    %v480 = vmul.f32 %v347, 0.70710677
    %v481 = vmul.f32 %v351, 0.70710677
    %v482 = vmul.f32 %v353, 0.70710677
    %v483 = vmul.f32 %v357, 0.70710677
    %v484 = vmul.f32 %v359, 0.70710677
    %v485 = vmul.f32 %v363, 0.70710677
    %v486 = vmul.f32 %v365, 0.70710677
    %v487 = vmul.f32 %v369, 0.70710677
    %v488 = vmul.f32 %v371, 0.70710677
    %v489 = vmul.f32 %v375, 0.70710677
    %v490 = vmul.f32 %v377, 0.70710677
    %v491 = vmul.f32 %v381, 0.70710677
    %v492 = vmul.f32 %v383, 0.70710677
    %v493 = vmul.f32 %v387, 0.70710677
    %v494 = vmul.f32 %v389, 0.70710677
    %v495 = verf.f32.pop %v443
    %v496 = verf.f32.pop %v444
    %v497 = verf.f32.pop %v445
    %v498 = verf.f32.pop %v446
    %v499 = verf.f32.pop %v447
    %v500 = verf.f32.pop %v448
    %v501 = verf.f32.pop %v449
    %v502 = verf.f32.pop %v450
    %v503 = verf.f32.pop %v451
    %v504 = verf.f32.pop %v452
    %v505 = verf.f32.pop %v453
    %v506 = verf.f32.pop %v454
    %v507 = verf.f32.pop %v455
    %v508 = verf.f32.pop %v456
    %v509 = verf.f32.pop %v457
    %v510 = verf.f32.pop %v458
    %v511 = verf.f32.pop %v459
    %v512 = verf.f32.pop %v460
    %v513 = verf.f32.pop %v461
    %v514 = verf.f32.pop %v462
    %v515 = verf.f32.pop %v463
    %v516 = verf.f32.pop %v464
    %v517 = verf.f32.pop %v465
    %v518 = verf.f32.pop %v466
    %v519 = verf.f32.pop %v467
    %v520 = verf.f32.pop %v468
    %v521 = verf.f32.pop %v469
    %v522 = verf.f32.pop %v470
    %v523 = verf.f32.pop %v471
    %v524 = verf.f32.pop %v472
    %v525 = verf.f32.pop %v473
    %v526 = verf.f32.pop %v474
    %v527 = verf.f32.pop %v475
    %v528 = verf.f32.pop %v476
    %v529 = verf.f32.pop %v477
    %v530 = verf.f32.pop %v478
    %v531 = verf.f32.pop %v479
    %v532 = verf.f32.pop %v480
    %v533 = verf.f32.pop %v481
    %v534 = verf.f32.pop %v482
    %v535 = verf.f32.pop %v483
    %v536 = verf.f32.pop %v484
    %v537 = verf.f32.pop %v485
    %v538 = verf.f32.pop %v486
    %v539 = verf.f32.pop %v487
    %v540 = verf.f32.pop %v488
    %v541 = verf.f32.pop %v489
    %v542 = verf.f32.pop %v490
    %v543 = verf.f32.pop %v491
    %v544 = verf.f32.pop %v492
    %v545 = verf.f32.pop %v493
    %v546 = verf.f32.pop %v494
    %v547 = vadd.f32 %v495, 1.0
    %v548 = vadd.f32 %v496, 1.0
    %v549 = vadd.f32 %v497, 1.0
    %v550 = vadd.f32 %v498, 1.0
    %v551 = vadd.f32 %v499, 1.0
    %v552 = vadd.f32 %v500, 1.0
    %v553 = vadd.f32 %v501, 1.0
    %v554 = vadd.f32 %v502, 1.0
    %v555 = vadd.f32 %v503, 1.0
    %v556 = vadd.f32 %v504, 1.0
    %v557 = vadd.f32 %v505, 1.0
    %v558 = vadd.f32 %v506, 1.0
    %v559 = vadd.f32 %v507, 1.0
    %v560 = vadd.f32 %v508, 1.0
    %v561 = vadd.f32 %v509, 1.0
    %v562 = vadd.f32 %v510, 1.0
    %v563 = vadd.f32 %v511, 1.0
    %v564 = vadd.f32 %v512, 1.0
    %v565 = vadd.f32 %v513, 1.0
    %v566 = vadd.f32 %v514, 1.0
    %v567 = vadd.f32 %v515, 1.0
    %v568 = vadd.f32 %v516, 1.0
    %v569 = vadd.f32 %v517, 1.0
    %v570 = vadd.f32 %v518, 1.0
    %v571 = vadd.f32 %v519, 1.0
    %v572 = vadd.f32 %v520, 1.0
    %v573 = vadd.f32 %v521, 1.0
    %v574 = vadd.f32 %v522, 1.0
    %v575 = vadd.f32 %v523, 1.0
    %v576 = vadd.f32 %v524, 1.0
    %v577 = vadd.f32 %v525, 1.0
    %v578 = vadd.f32 %v526, 1.0
    %v579 = vadd.f32 %v527, 1.0
    %v580 = vadd.f32 %v528, 1.0
    %v581 = vadd.f32 %v529, 1.0
    %v582 = vadd.f32 %v530, 1.0
    %v583 = vadd.f32 %v531, 1.0
    %v584 = vadd.f32 %v532, 1.0
    %v585 = vadd.f32 %v533, 1.0
    %v586 = vadd.f32 %v534, 1.0
    %v587 = vadd.f32 %v535, 1.0
    %v588 = vadd.f32 %v536, 1.0
    %v589 = vadd.f32 %v537, 1.0
    %v590 = vadd.f32 %v538, 1.0
    %v591 = vadd.f32 %v539, 1.0
    %v592 = vadd.f32 %v540, 1.0
    %v593 = vadd.f32 %v541, 1.0
    %v594 = vadd.f32 %v542, 1.0
    %v595 = vadd.f32 %v543, 1.0
    %v596 = vadd.f32 %v544, 1.0
    %v597 = vadd.f32 %v545, 1.0
    %v598 = vadd.f32 %v546, 1.0
    %v599 = vmul.f32 %v391, %v547
    %v600 = vmul.f32 %v392, %v548
    %v601 = vmul.f32 %v393, %v549
    %v602 = vmul.f32 %v394, %v550
    %v603 = vmul.f32 %v395, %v551
    %v604 = vmul.f32 %v396, %v552
    %v605 = vmul.f32 %v397, %v553
    %v606 = vmul.f32 %v398, %v554
    %v607 = vmul.f32 %v399, %v555
    %v608 = vmul.f32 %v400, %v556
    %v609 = vmul.f32 %v401, %v557
    %v610 = vmul.f32 %v402, %v558
    %v611 = vmul.f32 %v403, %v559
    %v612 = vmul.f32 %v404, %v560
    %v613 = vmul.f32 %v405, %v561
    %v614 = vmul.f32 %v406, %v562
    %v615 = vmul.f32 %v407, %v563
    %v616 = vmul.f32 %v408, %v564
    %v617 = vmul.f32 %v409, %v565
    %v618 = vmul.f32 %v410, %v566
    %v619 = vmul.f32 %v411, %v567
    %v620 = vmul.f32 %v412, %v568
    %v621 = vmul.f32 %v413, %v569
    %v622 = vmul.f32 %v414, %v570
    %v623 = vmul.f32 %v415, %v571
    %v624 = vmul.f32 %v416, %v572
    %v625 = vmul.f32 %v417, %v573
    %v626 = vmul.f32 %v418, %v574
    %v627 = vmul.f32 %v419, %v575
    %v628 = vmul.f32 %v420, %v576
    %v629 = vmul.f32 %v421, %v577
    %v630 = vmul.f32 %v422, %v578
    %v631 = vmul.f32 %v423, %v579
    %v632 = vmul.f32 %v424, %v580
    %v633 = vmul.f32 %v425, %v581
    %v634 = vmul.f32 %v426, %v582
    %v635 = vmul.f32 %v427, %v583
    %v636 = vmul.f32 %v428, %v584
    %v637 = vmul.f32 %v429, %v585
    %v638 = vmul.f32 %v430, %v586
    %v639 = vmul.f32 %v431, %v587
    %v640 = vmul.f32 %v432, %v588
    %v641 = vmul.f32 %v433, %v589
    %v642 = vmul.f32 %v434, %v590
    %v643 = vmul.f32 %v435, %v591
    %v644 = vmul.f32 %v436, %v592
    %v645 = vmul.f32 %v437, %v593
    %v646 = vmul.f32 %v438, %v594
    %v647 = vmul.f32 %v439, %v595
    %v648 = vmul.f32 %v440, %v596
    %v649 = vmul.f32 %v441, %v597
    %v650 = vmul.f32 %v442, %v598
    %v651 = vld [vmem:[#allocation2] sm:$0xff]
    %v652 = vld [vmem:[#allocation2 + $0x8] sm:$0xff]
    %v653 = vld [vmem:[#allocation2 + $0x10] sm:$0xff]
    %v654 = vld [vmem:[#allocation2 + $0x18] sm:$0xff]
    %v655 = vld [vmem:[#allocation2 + $0x20] sm:$0xff]
    %v656 = vld [vmem:[#allocation2 + $0x28] sm:$0xff]
    %v657 = vld [vmem:[#allocation2 + $0x30] sm:$0xff]
    %v658 = vld [vmem:[#allocation2 + $0x38] sm:$0xff]
    %v659 = vld [vmem:[#allocation2 + $0x40] sm:$0xff]
    %v660 = vld [vmem:[#allocation2 + $0x48] sm:$0xff]
    %v661 = vld [vmem:[#allocation2 + $0x50] sm:$0xff]
    %v662 = vld [vmem:[#allocation2 + $0x58] sm:$0xff]
    %v663 = vld [vmem:[#allocation2 + $0x60] sm:$0xff]
    %v664 = vld [vmem:[#allocation2 + $0x68] sm:$0xff]
    %v665 = vld [vmem:[#allocation2 + $0x70] sm:$0xff]
    %v666 = vld [vmem:[#allocation2 + $0x78] sm:$0xff]
    %v667 = vld [vmem:[#allocation2 + $0x80] sm:$0xff]
    %v668 = vld [vmem:[#allocation2 + $0x88] sm:$0xff]
    %v669 = vld [vmem:[#allocation2 + $0x90] sm:$0xff]
    %v670 = vld [vmem:[#allocation2 + $0x98] sm:$0xff]
    %v671 = vld [vmem:[#allocation2 + $0xa0] sm:$0xff]
    %v672 = vld [vmem:[#allocation2 + $0xa8] sm:$0xff]
    %v673 = vld [vmem:[#allocation2 + $0xb0] sm:$0xff]
    %v674 = vld [vmem:[#allocation2 + $0xb8] sm:$0xff]
    %v675 = vld [vmem:[#allocation2 + $0xc0] sm:$0xff]
    %v676 = vld [vmem:[#allocation2 + $0xc8] sm:$0xff]
    %v677 = vld [vmem:[#allocation8] sm:$0xff]
    %v678 = vld [vmem:[#allocation8 + $0x8] sm:$0xff]
    %v679 = vld [vmem:[#allocation8 + $0x10] sm:$0xff]
    %v680 = vld [vmem:[#allocation8 + $0x18] sm:$0xff]
    %v681 = vld [vmem:[#allocation8 + $0x20] sm:$0xff]
    %v682 = vld [vmem:[#allocation8 + $0x28] sm:$0xff]
    %v683 = vld [vmem:[#allocation8 + $0x30] sm:$0xff]
    %v684 = vld [vmem:[#allocation8 + $0x38] sm:$0xff]
    %v685 = vld [vmem:[#allocation8 + $0x40] sm:$0xff]
    %v686 = vld [vmem:[#allocation8 + $0x48] sm:$0xff]
    %v687 = vld [vmem:[#allocation8 + $0x50] sm:$0xff]
    %v688 = vld [vmem:[#allocation8 + $0x58] sm:$0xff]
    %v689 = vld [vmem:[#allocation8 + $0x60] sm:$0xff]
    %v690 = vld [vmem:[#allocation8 + $0x68] sm:$0xff]
    %v691 = vld [vmem:[#allocation8 + $0x70] sm:$0xff]
    %v692 = vld [vmem:[#allocation8 + $0x78] sm:$0xff]
    %v693 = vld [vmem:[#allocation8 + $0x80] sm:$0xff]
    %v694 = vld [vmem:[#allocation8 + $0x88] sm:$0xff]
    %v695 = vld [vmem:[#allocation8 + $0x90] sm:$0xff]
    %v696 = vld [vmem:[#allocation8 + $0x98] sm:$0xff]
    %v697 = vld [vmem:[#allocation8 + $0xa0] sm:$0xff]
    %v698 = vld [vmem:[#allocation8 + $0xa8] sm:$0xff]
    %v699 = vld [vmem:[#allocation8 + $0xb0] sm:$0xff]
    %v700 = vld [vmem:[#allocation8 + $0xb8] sm:$0xff]
    %v701 = vld [vmem:[#allocation8 + $0xc0] sm:$0xff]
    %v702 = vld [vmem:[#allocation8 + $0xc8] sm:$0xff]
    %v703 = vld [vmem:[#allocation8 + $0xd0] sm:$0xff]
    %v704 = vld [vmem:[#allocation8 + $0xd8] sm:$0xff]
    %v705 = vld [vmem:[#allocation8 + $0xe0] sm:$0xff]
    %v706 = vld [vmem:[#allocation8 + $0xe8] sm:$0xff]
    %v707 = vld [vmem:[#allocation8 + $0xf0] sm:$0xff]
    %v708 = vld [vmem:[#allocation8 + $0xf8] sm:$0xff]
    %709 = vmatprep.subr.mxu0 0.0
    %710 = vmatpush1.msra.mxu0 %v692
    %711 = vmatprep.subr.mxu0 0.0
    %712 = vmatpush1.msra.mxu0 %v691
    %713 = vmatprep.subr.mxu0 0.0
    %714 = vmatpush1.msra.mxu0 %v690
    %715 = vmatprep.subr.mxu0 0.0
    %716 = vmatpush1.msra.mxu0 %v689
    %717 = vmatprep.subr.mxu0 0.0
    %718 = vmatpush1.msra.mxu0 %v688
    %719 = vmatprep.subr.mxu0 0.0
    %720 = vmatpush1.msra.mxu0 %v687
    %721 = vmatprep.subr.mxu0 0.0
    %722 = vmatpush1.msra.mxu0 %v686
    %723 = vmatprep.subr.mxu0 0.0
    %724 = vmatpush1.msra.mxu0 %v685
    %725 = vmatprep.subr.mxu0 0.0
    %726 = vmatpush1.msra.mxu0 %v684
    %727 = vmatprep.subr.mxu0 0.0
    %728 = vmatpush1.msra.mxu0 %v683
    %729 = vmatprep.subr.mxu0 0.0
    %730 = vmatpush1.msra.mxu0 %v682
    %731 = vmatprep.subr.mxu0 0.0
    %732 = vmatpush1.msra.mxu0 %v681
    %733 = vmatprep.subr.mxu0 0.0
    %734 = vmatpush1.msra.mxu0 %v680
    %735 = vmatprep.subr.mxu0 0.0
    %736 = vmatpush1.msra.mxu0 %v679
    %737 = vmatprep.subr.mxu0 0.0
    %738 = vmatpush1.msra.mxu0 %v678
    %739 = vmatprep.subr.mxu0 0.0
    %740 = vmatpush1.msra.mxu0 %v677
    %741 = vmatprep.subr.mxu0 0.0
    %742 = vmatpush2.msra.mxu0 %v708
    %743 = vmatprep.subr.mxu0 0.0
    %744 = vmatpush2.msra.mxu0 %v707
    %745 = vmatprep.subr.mxu0 0.0
    %746 = vmatpush2.msra.mxu0 %v706
    %747 = vmatprep.subr.mxu0 0.0
    %748 = vmatpush2.msra.mxu0 %v705
    %749 = vmatprep.subr.mxu0 0.0
    %750 = vmatpush2.msra.mxu0 %v704
    %751 = vmatprep.subr.mxu0 0.0
    %752 = vmatpush2.msra.mxu0 %v703
    %753 = vmatprep.subr.mxu0 0.0
    %754 = vmatpush2.msra.mxu0 %v702
    %755 = vmatprep.subr.mxu0 0.0
    %756 = vmatpush2.msra.mxu0 %v701
    %757 = vmatprep.subr.mxu0 0.0
    %758 = vmatpush2.msra.mxu0 %v700
    %759 = vmatprep.subr.mxu0 0.0
    %760 = vmatpush2.msra.mxu0 %v699
    %761 = vmatprep.subr.mxu0 0.0
    %762 = vmatpush2.msra.mxu0 %v698
    %763 = vmatprep.subr.mxu0 0.0
    %764 = vmatpush2.msra.mxu0 %v697
    %765 = vmatprep.subr.mxu0 0.0
    %766 = vmatpush2.msra.mxu0 %v696
    %767 = vmatprep.subr.mxu0 0.0
    %768 = vmatpush2.msra.mxu0 %v695
    %769 = vmatprep.subr.mxu0 0.0
    %770 = vmatpush2.msra.mxu0 %v694
    %771 = vmatprep.subr.mxu0 0.0
    %772 = vmatpush2.msra.mxu0 %v693
    %773 = vmatprep.mubr.f32.mxu0 %v600
    %774 = vmatmul.mubr.f32.gmra.mxu0 %v599
    %v775 = vpop.f32.mrf.mxu0
    %v776 = vadd.f32 0.0, %v775
    %v777 = vpop.f32.mrf.mxu0
    %778 = vmatprep.mubr.f32.mxu0 %v602
    %779 = vmatmul.mubr.f32.gmra.mxu0 %v601
    %v780 = vpop.f32.mrf.mxu0
    %v781 = vadd.f32 0.0, %v780
    %v782 = vpop.f32.mrf.mxu0
    %783 = vmatprep.mubr.f32.mxu0 %v604
    %784 = vmatmul.mubr.f32.gmra.mxu0 %v603
    %v785 = vpop.f32.mrf.mxu0
    %v786 = vadd.f32 0.0, %v785
    %v787 = vpop.f32.mrf.mxu0
    %788 = vmatprep.mubr.f32.mxu0 %v606
    %789 = vmatmul.mubr.f32.gmra.mxu0 %v605
    %v790 = vpop.f32.mrf.mxu0
    %v791 = vadd.f32 0.0, %v790
    %v792 = vpop.f32.mrf.mxu0
    %793 = vmatprep.mubr.f32.mxu0 %v608
    %794 = vmatmul.mubr.f32.gmra.mxu0 %v607
    %v795 = vpop.f32.mrf.mxu0
    %v796 = vadd.f32 0.0, %v795
    %v797 = vpop.f32.mrf.mxu0
    %798 = vmatprep.mubr.f32.mxu0 %v610
    %799 = vmatmul.mubr.f32.gmra.mxu0 %v609
    %v800 = vpop.f32.mrf.mxu0
    %v801 = vadd.f32 0.0, %v800
    %v802 = vpop.f32.mrf.mxu0
    %803 = vmatprep.mubr.f32.mxu0 %v612
    %804 = vmatmul.mubr.f32.gmra.mxu0 %v611
    %v805 = vpop.f32.mrf.mxu0
    %v806 = vadd.f32 0.0, %v805
    %v807 = vpop.f32.mrf.mxu0
    %808 = vmatprep.mubr.f32.mxu0 %v614
    %809 = vmatmul.mubr.f32.gmra.mxu0 %v613
    %v810 = vpop.f32.mrf.mxu0
    %v811 = vadd.f32 0.0, %v810
    %v812 = vpop.f32.mrf.mxu0
    %813 = vmatprep.mubr.f32.mxu0 %v616
    %814 = vmatmul.mubr.f32.gmra.mxu0 %v615
    %v815 = vpop.f32.mrf.mxu0
    %v816 = vadd.f32 0.0, %v815
    %v817 = vpop.f32.mrf.mxu0
    %818 = vmatprep.mubr.f32.mxu0 %v618
    %819 = vmatmul.mubr.f32.gmra.mxu0 %v617
    %v820 = vpop.f32.mrf.mxu0
    %v821 = vadd.f32 0.0, %v820
    %v822 = vpop.f32.mrf.mxu0
    %823 = vmatprep.mubr.f32.mxu0 %v620
    %824 = vmatmul.mubr.f32.gmra.mxu0 %v619
    %v825 = vpop.f32.mrf.mxu0
    %v826 = vadd.f32 0.0, %v825
    %v827 = vpop.f32.mrf.mxu0
    %828 = vmatprep.mubr.f32.mxu0 %v622
    %829 = vmatmul.mubr.f32.gmra.mxu0 %v621
    %v830 = vpop.f32.mrf.mxu0
    %v831 = vadd.f32 0.0, %v830
    %v832 = vpop.f32.mrf.mxu0
    %833 = vmatprep.mubr.f32.mxu0 %v624
    %834 = vmatmul.mubr.f32.gmra.mxu0 %v623
    %v835 = vpop.f32.mrf.mxu0
    %v836 = vadd.f32 0.0, %v835
    %v837 = vpop.f32.mrf.mxu0
    %838 = vmatprep.mubr.f32.mxu0 %v626
    %839 = vmatmul.mubr.f32.gmra.mxu0 %v625
    %v840 = vpop.f32.mrf.mxu0
    %v841 = vadd.f32 0.0, %v840
    %v842 = vpop.f32.mrf.mxu0
    %843 = vmatprep.mubr.f32.mxu0 %v628
    %844 = vmatmul.mubr.f32.gmra.mxu0 %v627
    %v845 = vpop.f32.mrf.mxu0
    %v846 = vadd.f32 0.0, %v845
    %v847 = vpop.f32.mrf.mxu0
    %848 = vmatprep.mubr.f32.mxu0 %v630
    %849 = vmatmul.mubr.f32.gmra.mxu0 %v629
    %v850 = vpop.f32.mrf.mxu0
    %v851 = vadd.f32 0.0, %v850
    %v852 = vpop.f32.mrf.mxu0
    %853 = vmatprep.mubr.f32.mxu0 %v632
    %854 = vmatmul.mubr.f32.gmra.mxu0 %v631
    %v855 = vpop.f32.mrf.mxu0
    %v856 = vadd.f32 0.0, %v855
    %v857 = vpop.f32.mrf.mxu0
    %858 = vmatprep.mubr.f32.mxu0 %v634
    %859 = vmatmul.mubr.f32.gmra.mxu0 %v633
    %v860 = vpop.f32.mrf.mxu0
    %v861 = vadd.f32 0.0, %v860
    %v862 = vpop.f32.mrf.mxu0
    %863 = vmatprep.mubr.f32.mxu0 %v636
    %864 = vmatmul.mubr.f32.gmra.mxu0 %v635
    %v865 = vpop.f32.mrf.mxu0
    %v866 = vadd.f32 0.0, %v865
    %v867 = vpop.f32.mrf.mxu0
    %868 = vmatprep.mubr.f32.mxu0 %v638
    %869 = vmatmul.mubr.f32.gmra.mxu0 %v637
    %v870 = vpop.f32.mrf.mxu0
    %v871 = vadd.f32 0.0, %v870
    %v872 = vpop.f32.mrf.mxu0
    %873 = vmatprep.mubr.f32.mxu0 %v640
    %874 = vmatmul.mubr.f32.gmra.mxu0 %v639
    %v875 = vpop.f32.mrf.mxu0
    %v876 = vadd.f32 0.0, %v875
    %v877 = vpop.f32.mrf.mxu0
    %878 = vmatprep.mubr.f32.mxu0 %v642
    %879 = vmatmul.mubr.f32.gmra.mxu0 %v641
    %v880 = vpop.f32.mrf.mxu0
    %v881 = vadd.f32 0.0, %v880
    %v882 = vpop.f32.mrf.mxu0
    %883 = vmatprep.mubr.f32.mxu0 %v644
    %884 = vmatmul.mubr.f32.gmra.mxu0 %v643
    %v885 = vpop.f32.mrf.mxu0
    %v886 = vadd.f32 0.0, %v885
    %v887 = vpop.f32.mrf.mxu0
    %888 = vmatprep.mubr.f32.mxu0 %v646
    %889 = vmatmul.mubr.f32.gmra.mxu0 %v645
    %v890 = vpop.f32.mrf.mxu0
    %v891 = vadd.f32 0.0, %v890
    %v892 = vpop.f32.mrf.mxu0
    %893 = vmatprep.mubr.f32.mxu0 %v648
    %894 = vmatmul.mubr.f32.gmra.mxu0 %v647
    %v895 = vpop.f32.mrf.mxu0
    %v896 = vadd.f32 0.0, %v895
    %v897 = vpop.f32.mrf.mxu0
    %898 = vmatprep.mubr.f32.mxu0 %v650
    %899 = vmatmul.mubr.f32.gmra.mxu0 %v649
    %v900 = vpop.f32.mrf.mxu0
    %v901 = vadd.f32 0.0, %v900
    %v902 = vpop.f32.mrf.mxu0
    %903 = vdwg.mxu0
    %v904 = vadd.f32 %v651, %v776
    %v905 = vadd.f32 %v652, %v781
    %v906 = vadd.f32 %v653, %v786
    %v907 = vadd.f32 %v654, %v791
    %v908 = vadd.f32 %v655, %v796
    %v909 = vadd.f32 %v656, %v801
    %v910 = vadd.f32 %v657, %v806
    %v911 = vadd.f32 %v658, %v811
    %v912 = vadd.f32 %v659, %v816
    %v913 = vadd.f32 %v660, %v821
    %v914 = vadd.f32 %v661, %v826
    %v915 = vadd.f32 %v662, %v831
    %v916 = vadd.f32 %v663, %v836
    %v917 = vadd.f32 %v664, %v841
    %v918 = vadd.f32 %v665, %v846
    %v919 = vadd.f32 %v666, %v851
    %v920 = vadd.f32 %v667, %v856
    %v921 = vadd.f32 %v668, %v861
    %v922 = vadd.f32 %v669, %v866
    %v923 = vadd.f32 %v670, %v871
    %v924 = vadd.f32 %v671, %v876
    %v925 = vadd.f32 %v672, %v881
    %v926 = vadd.f32 %v673, %v886
    %v927 = vadd.f32 %v674, %v891
    %v928 = vadd.f32 %v675, %v896
    %v929 = vadd.f32 %v676, %v901
    %930 = vst [vmem:[#allocation2] sm:$0xff] %v904
    %931 = vst [vmem:[#allocation2 + $0x8] sm:$0xff] %v905
    %932 = vst [vmem:[#allocation2 + $0x10] sm:$0xff] %v906
    %933 = vst [vmem:[#allocation2 + $0x18] sm:$0xff] %v907
    %934 = vst [vmem:[#allocation2 + $0x20] sm:$0xff] %v908
    %935 = vst [vmem:[#allocation2 + $0x28] sm:$0xff] %v909
    %936 = vst [vmem:[#allocation2 + $0x30] sm:$0xff] %v910
    %937 = vst [vmem:[#allocation2 + $0x38] sm:$0xff] %v911
    %938 = vst [vmem:[#allocation2 + $0x40] sm:$0xff] %v912
    %939 = vst [vmem:[#allocation2 + $0x48] sm:$0xff] %v913
    %940 = vst [vmem:[#allocation2 + $0x50] sm:$0xff] %v914
    %941 = vst [vmem:[#allocation2 + $0x58] sm:$0xff] %v915
    %942 = vst [vmem:[#allocation2 + $0x60] sm:$0xff] %v916
    %943 = vst [vmem:[#allocation2 + $0x68] sm:$0xff] %v917
    %944 = vst [vmem:[#allocation2 + $0x70] sm:$0xff] %v918
    %945 = vst [vmem:[#allocation2 + $0x78] sm:$0xff] %v919
    %946 = vst [vmem:[#allocation2 + $0x80] sm:$0xff] %v920
    %947 = vst [vmem:[#allocation2 + $0x88] sm:$0xff] %v921
    %948 = vst [vmem:[#allocation2 + $0x90] sm:$0xff] %v922
    %949 = vst [vmem:[#allocation2 + $0x98] sm:$0xff] %v923
    %950 = vst [vmem:[#allocation2 + $0xa0] sm:$0xff] %v924
    %951 = vst [vmem:[#allocation2 + $0xa8] sm:$0xff] %v925
    %952 = vst [vmem:[#allocation2 + $0xb0] sm:$0xff] %v926
    %953 = vst [vmem:[#allocation2 + $0xb8] sm:$0xff] %v927
    %954 = vst [vmem:[#allocation2 + $0xc0] sm:$0xff] %v928
    %955 = vst [vmem:[#allocation2 + $0xc8] sm:$0xff] %v929
    // Predicated region
    $region38: #{tpu_custom_call.1} parent=1 // pred_check
      %p956 = pneg %p62
    $region39: #{tpu_custom_call.1} parent=1 // pred_check_branch
      %958 = sbr.rel (%p956) target = $region41
    $region40: #{tpu_custom_call.1} parent=1 // pred_region
      %v959 = vld [vmem:[#allocation2] sm:$0xff]
      %v960 = vld [vmem:[#allocation2 + $0x8] sm:$0xff]
      %v961 = vld [vmem:[#allocation2 + $0x10] sm:$0xff]
      %v962 = vld [vmem:[#allocation2 + $0x18] sm:$0xff]
      %v963 = vld [vmem:[#allocation2 + $0x20] sm:$0xff]
      %v964 = vld [vmem:[#allocation2 + $0x28] sm:$0xff]
      %v965 = vld [vmem:[#allocation2 + $0x30] sm:$0xff]
      %v966 = vld [vmem:[#allocation2 + $0x38] sm:$0xff]
      %v967 = vld [vmem:[#allocation2 + $0x40] sm:$0xff]
      %v968 = vld [vmem:[#allocation2 + $0x48] sm:$0xff]
      %v969 = vld [vmem:[#allocation2 + $0x50] sm:$0xff]
      %v970 = vld [vmem:[#allocation2 + $0x58] sm:$0xff]
      %v971 = vld [vmem:[#allocation2 + $0x60] sm:$0xff]
      %v972 = vld [vmem:[#allocation2 + $0x68] sm:$0xff]
      %v973 = vld [vmem:[#allocation2 + $0x70] sm:$0xff]
      %v974 = vld [vmem:[#allocation2 + $0x78] sm:$0xff]
      %v975 = vld [vmem:[#allocation2 + $0x80] sm:$0xff]
      %v976 = vld [vmem:[#allocation2 + $0x88] sm:$0xff]
      %v977 = vld [vmem:[#allocation2 + $0x90] sm:$0xff]
      %v978 = vld [vmem:[#allocation2 + $0x98] sm:$0xff]
      %v979 = vld [vmem:[#allocation2 + $0xa0] sm:$0xff]
      %v980 = vld [vmem:[#allocation2 + $0xa8] sm:$0xff]
      %v981 = vld [vmem:[#allocation2 + $0xb0] sm:$0xff]
      %v982 = vld [vmem:[#allocation2 + $0xb8] sm:$0xff]
      %v983 = vld [vmem:[#allocation2 + $0xc0] sm:$0xff]
      %v984 = vld [vmem:[#allocation2 + $0xc8] sm:$0xff]
      %985 = vst [vmem:[#allocation9] sm:$0xff] %v959
      %986 = vst [vmem:[#allocation9 + $0x8] sm:$0xff] %v960
      %987 = vst [vmem:[#allocation9 + $0x10] sm:$0xff] %v961
      %988 = vst [vmem:[#allocation9 + $0x18] sm:$0xff] %v962
      %989 = vst [vmem:[#allocation9 + $0x20] sm:$0xff] %v963
      %990 = vst [vmem:[#allocation9 + $0x28] sm:$0xff] %v964
      %991 = vst [vmem:[#allocation9 + $0x30] sm:$0xff] %v965
      %992 = vst [vmem:[#allocation9 + $0x38] sm:$0xff] %v966
      %993 = vst [vmem:[#allocation9 + $0x40] sm:$0xff] %v967
      %994 = vst [vmem:[#allocation9 + $0x48] sm:$0xff] %v968
      %995 = vst [vmem:[#allocation9 + $0x50] sm:$0xff] %v969
      %996 = vst [vmem:[#allocation9 + $0x58] sm:$0xff] %v970
      %997 = vst [vmem:[#allocation9 + $0x60] sm:$0xff] %v971
      %998 = vst [vmem:[#allocation9 + $0x68] sm:$0xff] %v972
      %999 = vst [vmem:[#allocation9 + $0x70] sm:$0xff] %v973
      %1000 = vst [vmem:[#allocation9 + $0x78] sm:$0xff] %v974
      %1001 = vst [vmem:[#allocation9 + $0x80] sm:$0xff] %v975
      %1002 = vst [vmem:[#allocation9 + $0x88] sm:$0xff] %v976
      %1003 = vst [vmem:[#allocation9 + $0x90] sm:$0xff] %v977
      %1004 = vst [vmem:[#allocation9 + $0x98] sm:$0xff] %v978
      %1005 = vst [vmem:[#allocation9 + $0xa0] sm:$0xff] %v979
      %1006 = vst [vmem:[#allocation9 + $0xa8] sm:$0xff] %v980
      %1007 = vst [vmem:[#allocation9 + $0xb0] sm:$0xff] %v981
      %1008 = vst [vmem:[#allocation9 + $0xb8] sm:$0xff] %v982
      %1009 = vst [vmem:[#allocation9 + $0xc0] sm:$0xff] %v983
      %1010 = vst [vmem:[#allocation9 + $0xc8] sm:$0xff] %v984
    $region41: #{tpu_custom_call.1} parent=1 // pred_fallthru
      _
    // Predicated region
    $region42: #{tpu_custom_call.1} parent=1 // pred_check
      _
    $region43: #{tpu_custom_call.1} parent=1 // pred_check_branch
      %1012 = sbr.rel (0) target = $region45
    $region44: #{tpu_custom_call.1} parent=1 // pred_region
      %s1014 = ssub.s32 3328, 3328
      %1015 = vsyncadd [#allocation5], %s1014
      %s1016 = sshll.u32 [#allocation9], 4
      %s1017 = int_to_ptr.vmem [resolvable:$true] %s1016
      %1022 = dma.vmem_to_hbm [thread:$0]  %s1017, 3328, %s5, [#allocation5], 128, 128, 8
    $region45: #{tpu_custom_call.1} parent=1 // pred_fallthru
      _
    // Predicated region
    $region46: #{tpu_custom_call.1} parent=1 // pred_check
      _
    $region47: #{tpu_custom_call.1} parent=1 // pred_check_branch
      %1024 = sbr.rel (0) target = $region49
    $region48: #{tpu_custom_call.1} parent=1 // pred_region
      %1025 = dma.done [#allocation5], 3328
    $region49: #{tpu_custom_call.1} parent=1 // pred_fallthru
      _
    %1026 = vsyncpa [#allocation4], 1
    %1027 = vsyncpa [#allocation7], 1
    %1028 = vsyncpa [#allocation5], 1

</llo_original>
